<compile_context>
chip_gen: v7x
topology: tpu7x:2x2x1
jax: 0.10.0
libtpu: 0.0.40
codegen_flags: <defaults>
</compile_context>

<pallas_src>
import functools

import numpy as np

import jax
import jax.numpy as jnp
from jax.experimental import pallas as pl
from jax.experimental.pallas import tpu as pltpu


COMPUTE_DTYPE = jnp.bfloat16      # MXU / activation-scratch dtype (f32 accumulation)


# ----------------------------------------------------------------------------
# Fused encoder kernel (runs once; everything resident in VMEM)
# ----------------------------------------------------------------------------
def _encoder_kernel(x0_ref, w1_ref, b1_ref, w2_ref, b2_ref, w3_ref, b3_ref,
                    wfc_ref, bfc_ref, out_ref, p2_ref, p3_ref, *,
                    ho1, ho2, ho3, batch):
    """Whole Encoder forward.

    x0_ref : (Hp1/2*B, 2*K1) pair-folded, zero-padded input rows, bf16
    wL_ref : (2, 2*KL, NL)   [A0;A1] and [A2;A3] stacked conv+BN matrices, bf16
    bL_ref : (1, NL)         folded BN shift, zero at pad columns, f32
    wfc_ref: (3*N3, Hd_pad)  FC weight, rows permuted to (h, w, c) order, bf16
    bfc_ref: (1, Hd_pad)     FC bias (zero-padded), f32
    out_ref: (B, Hd_pad)     lane-dense output
    p2_ref : (Hp2/2*B, 2*N1) VMEM scratch: conv2's pair-folded padded input
    p3_ref : (Hp3/2*B, 2*N2) VMEM scratch: conv3's pair-folded padded input
    """
    B = batch

    def conv_slab(buf_ref, w_ref, b_ref, ho):
        # All `ho` output rows of one conv+BN+ReLU layer as one slab.
        # Output row h needs padded rows 2h..2h+3 = pair h (taps 0,1) and
        # pair h+1 (taps 2,3) -> two dots, M = ho*B, K = 2*Kin.
        lo = buf_ref[0:ho * B, :]
        hi = buf_ref[B:(ho + 1) * B, :]
        acc = jnp.dot(lo, w_ref[0], preferred_element_type=jnp.float32)
        acc = acc + jnp.dot(hi, w_ref[1], preferred_element_type=jnp.float32)
        return jnp.maximum(acc + b_ref[...], 0.0)            # (ho*B, N) f32

    def split_store(y, dst_ref, ho, n):
        # Output row h -> padded row h+1 of the next layer: even h land in the
        # second lane-half of pair h/2, odd h in the first lane-half of pair
        # (h+1)/2.  After a cheap parity de-interleave the writeback is two
        # contiguous lane-aligned stores (no per-row masked stores).
        m = ho // 2
        even = jnp.concatenate(
            [y[(2 * t) * B:(2 * t + 1) * B] for t in range(m)], axis=0)
        odd = jnp.concatenate(
            [y[(2 * t + 1) * B:(2 * t + 2) * B] for t in range(m)], axis=0)
        dst_ref[0:m * B, n:2 * n] = even.astype(dst_ref.dtype)
        dst_ref[B:(m + 1) * B, 0:n] = odd.astype(dst_ref.dtype)

    n1 = p2_ref.shape[1] // 2
    n2 = p3_ref.shape[1] // 2

    # Zero only the halo half-rows (padded rows 0 and Hp-1); interior rows are
    # fully overwritten and their W-pad columns come out as ReLU(0) = 0 from
    # the zero columns / zero bias baked into the structured weights.
    zero1 = jnp.zeros((B, n1), p2_ref.dtype)
    zero2 = jnp.zeros((B, n2), p3_ref.dtype)
    p2_ref[0:B, 0:n1] = zero1
    p2_ref[p2_ref.shape[0] - B:p2_ref.shape[0], n1:2 * n1] = zero1
    p3_ref[0:B, 0:n2] = zero2
    p3_ref[p3_ref.shape[0] - B:p3_ref.shape[0], n2:2 * n2] = zero2

    # conv1 + BN + ReLU  ->  conv2's padded pair buffer (bf16, VMEM resident)
    split_store(conv_slab(x0_ref, w1_ref, b1_ref, ho1), p2_ref, ho1, n1)
    # conv2 + BN + ReLU  ->  conv3's padded pair buffer
    split_store(conv_slab(p2_ref, w2_ref, b2_ref, ho2), p3_ref, ho2, n2)
    # conv3 + BN + ReLU -> res_block (Identity) -> flatten (h, w, c) -> fc
    y3 = conv_slab(p3_ref, w3_ref, b3_ref, ho3)              # (ho3*B, N3) f32
    lhs = jnp.concatenate([y3[h * B:(h + 1) * B] for h in range(ho3)], axis=1)
    fc = jnp.dot(lhs.astype(wfc_ref.dtype), wfc_ref[...],
                 preferred_element_type=jnp.float32)
    out_ref[...] = (fc + bfc_ref[...]).astype(out_ref.dtype)


# ----------------------------------------------------------------------------
# Wrapper: one pallas_call for the whole forward pass
# ----------------------------------------------------------------------------
def _full_block(shape):
    nd = len(shape)
    return pl.BlockSpec(shape, lambda i: (0,) * nd)


@functools.partial(jax.jit, static_argnames=("h_dim",))
def encoder_forward(x_nchw, kp, *, h_dim):
    """x_nchw: (B, C, H, W) f32.  kp: dict from prepare_kernel_params."""
    B, C, H, W = x_nchw.shape
    ho1, ho2, ho3 = H // 2, H // 4, H // 8
    hp1, wp1 = H + 2, W + 2
    k1 = kp["w1"].shape[1] // 2           # lane width of one packed input row
    n1 = kp["w2"].shape[1] // 2           # lane width of one conv1-output row
    n2 = kp["w3"].shape[1] // 2           # lane width of one conv2-output row
    n3 = kp["w3"].shape[2]                # lane width of one conv3-output row
    hd_pad = kp["wfc"].shape[1]

    # NCHW -> zero-padded channels-last rows, pair-folded along lanes and
    # ordered (pair, batch) along sublanes: x0[p*B + b, :] = [row 2p | row 2p+1]
    x = jnp.transpose(x_nchw, (0, 2, 3, 1)).astype(jnp.float32)      # NHWC
    x = jnp.pad(x, ((0, 0), (1, 1), (1, 1), (0, 0)))                  # spatial pad
    x = x.reshape(B, hp1, wp1 * C)
    x = jnp.pad(x, ((0, 0), (0, 0), (0, k1 - wp1 * C)))               # lane pad
    x = x.reshape(B, hp1 // 2, 2 * k1)                                # pair fold
    x0 = jnp.transpose(x, (1, 0, 2)).reshape((hp1 // 2) * B, 2 * k1)
    x0 = x0.astype(COMPUTE_DTYPE)

    operands = (x0, kp["w1"], kp["b1"], kp["w2"], kp["b2"],
                kp["w3"], kp["b3"], kp["wfc"], kp["bfc"])
    in_specs = [_full_block(op.shape) for op in operands]

    npairs2 = (ho1 + 2) // 2
    npairs3 = (ho2 + 2) // 2

    macs = (2 * (ho1 * B) * (2 * k1) * n1 +
            2 * (ho2 * B) * (2 * n1) * n2 +
            2 * (ho3 * B) * (2 * n2) * n3 +
            B * (ho3 * n3) * hd_pad)
    bytes_accessed = sum(int(np.prod(op.shape)) * op.dtype.itemsize
                         for op in operands) + B * hd_pad * 4

    kern = functools.partial(_encoder_kernel, ho1=ho1, ho2=ho2, ho3=ho3, batch=B)
    out = pl.pallas_call(
        kern,
        out_shape=jax.ShapeDtypeStruct((B, hd_pad), jnp.float32),
        grid=(1,),
        in_specs=in_specs,
        out_specs=pl.BlockSpec((B, hd_pad), lambda i: (0, 0)),
        scratch_shapes=[
            pltpu.VMEM((npairs2 * B, 2 * n1), COMPUTE_DTYPE),   # conv2 input
            pltpu.VMEM((npairs3 * B, 2 * n2), COMPUTE_DTYPE),   # conv3 input
        ],
        cost_estimate=pl.CostEstimate(flops=2 * macs, transcendentals=0,
                                      bytes_accessed=int(bytes_accessed)),
    )(*operands)
    return out[:, :h_dim]


# ----------------------------------------------------------------------------
# Parameter construction (synthetic torch-style) and offline folding
# ----------------------------------------------------------------------------
def make_torch_style_params(key, in_channels, compression, h_dim):
    """Synthetic parameters laid out exactly like the PyTorch module."""
    c1, c2, c3 = compression, compression * 2, compression * 4
    flatten_dim = c3 * 3 * 3
    ks = jax.random.split(key, 11)

    def conv_w(k, cin, cout):             # torch Conv2d weight: (cout, cin, kh, kw)
        return 0.05 * jax.random.normal(k, (cout, cin, 4, 4), jnp.float32)

    def bn(kg, kb, cout):                 # BatchNorm2d running stats (eval mode)
        return dict(gamma=1.0 + 0.1 * jax.random.normal(kg, (cout,), jnp.float32),
                    beta=0.1 * jax.random.normal(kb, (cout,), jnp.float32),
                    mean=jnp.zeros((cout,), jnp.float32),
                    var=jnp.ones((cout,), jnp.float32))

    return {
        "conv1_w": conv_w(ks[0], in_channels, c1), "bn1": bn(ks[1], ks[2], c1),
        "conv2_w": conv_w(ks[3], c1, c2),          "bn2": bn(ks[4], ks[5], c2),
        "conv3_w": conv_w(ks[6], c2, c3),          "bn3": bn(ks[7], ks[8], c3),
        "fc_w": 0.05 * jax.random.normal(ks[9], (h_dim, flatten_dim), jnp.float32),
        "fc_b": 0.1 * jax.random.normal(ks[10], (h_dim,), jnp.float32),
    }


def _lane_pad(n):
    return ((n + 127) // 128) * 128


def _build_conv_taps(conv_w, bn, wo, k_in, n_out, col_off, eps=1e-5):
    """Structured per-tap-row matrices for Conv2d(k=4, s=2, p=1, bias=False)+BN.

    Returns A (4, k_in, n_out) and bias_row (1, n_out), f32 numpy.
    Output column layout: col_off + ow*cout + co ; all other columns are zero
    (they become the next layer's W-padding / lane padding).
    """
    w = np.asarray(conv_w).transpose(2, 3, 1, 0)               # (kh, kw, cin, cout)
    gamma = np.asarray(bn["gamma"]); beta = np.asarray(bn["beta"])
    mean = np.asarray(bn["mean"]);   var = np.asarray(bn["var"])
    scale = gamma / np.sqrt(var + eps)
    shift = beta - mean * scale
    wf = w * scale[None, None, None, :]                        # fold BN scale

    kh, kw, cin, cout = wf.shape
    A = np.zeros((kh, k_in, n_out), np.float32)
    brow = np.zeros((1, n_out), np.float32)
    for ow in range(wo):
        lo = col_off + ow * cout
        brow[0, lo:lo + cout] = shift
        for i in range(kh):
            for j in range(kw):
                p = 2 * ow + j                                 # padded input column
                A[i, p * cin:(p + 1) * cin, lo:lo + cout] = wf[i, j]
    return A, brow


def _stack_taps(a):
    """(4, K, N) per-tap matrices -> (2, 2K, N): [A0;A1] and [A2;A3]."""
    return np.stack([np.concatenate([a[0], a[1]], axis=0),
                     np.concatenate([a[2], a[3]], axis=0)], axis=0)


def prepare_kernel_params(tp, in_channels, compression, h_dim, spatial):
    """One-time offline folding: BN -> weights/bias, stride+padding -> structured
    matrices stacked along K (pair folding), torch (C,H,W) FC flatten order ->
    kernel (h,w,c) order, h_dim padded to 128 lanes."""
    c1, c2, c3 = compression, compression * 2, compression * 4
    wo1, wo2, wo3 = spatial // 2, spatial // 4, spatial // 8
    assert wo3 == 3, "Encoder.flatten_dim assumes a 24x24 input (3x3 final map)"

    k1 = _lane_pad((spatial + 2) * in_channels)   # packed input row width
    n1 = _lane_pad((wo1 + 2) * c1)                # padded conv1-output row width
    n2 = _lane_pad((wo2 + 2) * c2)                # padded conv2-output row width
    n3 = _lane_pad(wo3 * c3)                      # conv3-output row width
    hd_pad = _lane_pad(h_dim)

    a1, b1 = _build_conv_taps(tp["conv1_w"], tp["bn1"], wo1, k1, n1, col_off=c1)
    a2, b2 = _build_conv_taps(tp["conv2_w"], tp["bn2"], wo2, n1, n2, col_off=c2)
    a3, b3 = _build_conv_taps(tp["conv3_w"], tp["bn3"], wo3, n2, n3, col_off=0)

    # torch flattens (C, H, W); the kernel lane-concatenates rows in (h, w, c)
    # order -> permute FC rows offline and pad both dims to lane width.
    wfc = np.asarray(tp["fc_w"]).T                              # (flatten, h_dim)
    wfc = wfc.reshape(c3, 3, 3, h_dim).transpose(1, 2, 0, 3)    # (h, w, c, h_dim)
    wfc = wfc.reshape(3, 3 * c3, h_dim)
    wfc = np.pad(wfc, ((0, 0), (0, n3 - 3 * c3), (0, 0)))       # per-h lane pad
    wfc = wfc.reshape(3 * n3, h_dim)
    wfc = np.pad(wfc, ((0, 0), (0, hd_pad - h_dim)))            # (3*n3, hd_pad)
    bfc = np.pad(np.asarray(tp["fc_b"])[None, :], ((0, 0), (0, hd_pad - h_dim)))

    return {
        "w1": jnp.asarray(_stack_taps(a1), COMPUTE_DTYPE),
        "b1": jnp.asarray(b1, jnp.float32),
        "w2": jnp.asarray(_stack_taps(a2), COMPUTE_DTYPE),
        "b2": jnp.asarray(b2, jnp.float32),
        "w3": jnp.asarray(_stack_taps(a3), COMPUTE_DTYPE),
        "b3": jnp.asarray(b3, jnp.float32),
        "wfc": jnp.asarray(wfc, COMPUTE_DTYPE),
        "bfc": jnp.asarray(bfc, jnp.float32),
    }


# ----------------------------------------------------------------------------
# Pure-JAX reference (eval-mode BN), for a correctness sanity check
# ----------------------------------------------------------------------------
def encoder_reference(x, tp, eps=1e-5):
    def conv_bn_relu(x, w, bn):
        y = jax.lax.conv_general_dilated(
            x, jnp.asarray(w), window_strides=(2, 2), padding=((1, 1), (1, 1)),
            dimension_numbers=("NCHW", "OIHW", "NCHW"))
        scale = bn["gamma"] / jnp.sqrt(bn["var"] + eps)
        shift = bn["beta"] - bn["mean"] * scale
        y = y * scale[None, :, None, None] + shift[None, :, None, None]
        return jnp.maximum(y, 0.0)

    y = conv_bn_relu(x, tp["conv1_w"], tp["bn1"])
    y = conv_bn_relu(y, tp["conv2_w"], tp["bn2"])
    y = conv_bn_relu(y, tp["conv3_w"], tp["bn3"])
    y = y.reshape(y.shape[0], -1)                      # torch (C,H,W) flatten
    return y @ tp["fc_w"].T + tp["fc_b"]


if __name__ == "__main__":
    in_channels = 4
    compression = 8
    h_dim = 32
    batch = 2
    spatial = 24      # 24 -> 12 -> 6 -> 3, matching flatten_dim = compression*4*3*3

    key = jax.random.PRNGKey(0)
    kx, kparam = jax.random.split(key)
    x = jax.random.normal(kx, (batch, in_channels, spatial, spatial), jnp.float32)

    torch_params = make_torch_style_params(kparam, in_channels, compression, h_dim)
    kernel_params = prepare_kernel_params(torch_params, in_channels, compression,
                                          h_dim, spatial)

    out = jax.block_until_ready(encoder_forward(x, kernel_params, h_dim=h_dim))
    assert out.shape == (batch, h_dim), out.shape
    assert bool(jnp.all(jnp.isfinite(out)))

    ref = jax.block_until_ready(encoder_reference(x, torch_params))
    np.testing.assert_allclose(np.asarray(out), np.asarray(ref),
                               rtol=5e-2, atol=5e-2)
    print("KERNEL_OK")
</pallas_src>

<mosaic_0001>
module attributes {stable_mosaic.version = 11 : i64} {
  func.func @_encoder_kernel(%arg0: i32, %arg1: memref<26x256xbf16, #tpu.memory_space<vmem>>, %arg2: memref<2x256x128xbf16, #tpu.memory_space<vmem>>, %arg3: memref<1x128xf32, #tpu.memory_space<vmem>>, %arg4: memref<2x256x128xbf16, #tpu.memory_space<vmem>>, %arg5: memref<1x128xf32, #tpu.memory_space<vmem>>, %arg6: memref<2x256x128xbf16, #tpu.memory_space<vmem>>, %arg7: memref<1x128xf32, #tpu.memory_space<vmem>>, %arg8: memref<384x128xbf16, #tpu.memory_space<vmem>>, %arg9: memref<1x128xf32, #tpu.memory_space<vmem>>, %arg10: memref<2x128xf32, #tpu.memory_space<vmem>>, %arg11: memref<14x256xbf16, #tpu.memory_space<vmem>>, %arg12: memref<8x256xbf16, #tpu.memory_space<vmem>>) attributes {dimension_semantics = [#tpu.dimension_semantics<arbitrary>], iteration_bounds = array<i64: 1>, scalar_prefetch = 0 : i64, scratch_operands = 2 : i64, tpu.core_type = #tpu.core_type<tc>, window_params = [{pipeline_mode = #tpu.pipeline_mode<synchronous>, transform_indices = @transform_0, window_bounds = array<i64: 26, 256>}, {pipeline_mode = #tpu.pipeline_mode<synchronous>, transform_indices = @transform_1, window_bounds = array<i64: 2, 256, 128>}, {pipeline_mode = #tpu.pipeline_mode<synchronous>, transform_indices = @transform_2, window_bounds = array<i64: 1, 128>}, {pipeline_mode = #tpu.pipeline_mode<synchronous>, transform_indices = @transform_3, window_bounds = array<i64: 2, 256, 128>}, {pipeline_mode = #tpu.pipeline_mode<synchronous>, transform_indices = @transform_4, window_bounds = array<i64: 1, 128>}, {pipeline_mode = #tpu.pipeline_mode<synchronous>, transform_indices = @transform_5, window_bounds = array<i64: 2, 256, 128>}, {pipeline_mode = #tpu.pipeline_mode<synchronous>, transform_indices = @transform_6, window_bounds = array<i64: 1, 128>}, {pipeline_mode = #tpu.pipeline_mode<synchronous>, transform_indices = @transform_7, window_bounds = array<i64: 384, 128>}, {pipeline_mode = #tpu.pipeline_mode<synchronous>, transform_indices = @transform_8, window_bounds = array<i64: 1, 128>}, {pipeline_mode = #tpu.pipeline_mode<synchronous>, transform_indices = @transform_9, window_bounds = array<i64: 2, 128>}]} {
    %cst = arith.constant 0.000000e+00 : bf16
    %0 = vector.broadcast %cst : bf16 to vector<2x128xbf16>
    %cst_0 = arith.constant 0.000000e+00 : bf16
    %1 = vector.broadcast %cst_0 : bf16 to vector<2x128xbf16>
    %c0 = arith.constant 0 : index
    %c0_1 = arith.constant 0 : index
    %2 = vector.load %arg11[%c0, %c0_1] : memref<14x256xbf16, #tpu.memory_space<vmem>>, vector<2x128xbf16>
    tpu.vector_store %arg11[%c0, %c0_1], %0 {strides = array<i32>} : memref<14x256xbf16, #tpu.memory_space<vmem>>, vector<2x128xbf16>,
    %c12 = arith.constant 12 : index
    %c128 = arith.constant 128 : index
    %3 = vector.load %arg11[%c12, %c128] : memref<14x256xbf16, #tpu.memory_space<vmem>>, vector<2x128xbf16>
    tpu.vector_store %arg11[%c12, %c128], %0 {strides = array<i32>} : memref<14x256xbf16, #tpu.memory_space<vmem>>, vector<2x128xbf16>,
    %c0_2 = arith.constant 0 : index
    %c0_3 = arith.constant 0 : index
    %4 = vector.load %arg12[%c0_2, %c0_3] : memref<8x256xbf16, #tpu.memory_space<vmem>>, vector<2x128xbf16>
    tpu.vector_store %arg12[%c0_2, %c0_3], %1 {strides = array<i32>} : memref<8x256xbf16, #tpu.memory_space<vmem>>, vector<2x128xbf16>,
    %c6 = arith.constant 6 : index
    %c128_4 = arith.constant 128 : index
    %5 = vector.load %arg12[%c6, %c128_4] : memref<8x256xbf16, #tpu.memory_space<vmem>>, vector<2x128xbf16>
    tpu.vector_store %arg12[%c6, %c128_4], %1 {strides = array<i32>} : memref<8x256xbf16, #tpu.memory_space<vmem>>, vector<2x128xbf16>,
    %c0_5 = arith.constant 0 : index
    %c0_6 = arith.constant 0 : index
    %6 = vector.load %arg1[%c0_5, %c0_6] : memref<26x256xbf16, #tpu.memory_space<vmem>>, vector<24x256xbf16>
    %c2 = arith.constant 2 : index
    %c0_7 = arith.constant 0 : index
    %7 = vector.load %arg1[%c2, %c0_7] : memref<26x256xbf16, #tpu.memory_space<vmem>>, vector<24x256xbf16>
    %c0_8 = arith.constant 0 : index
    %c0_9 = arith.constant 0 : index
    %c0_10 = arith.constant 0 : index
    %8 = vector.load %arg2[%c0_8, %c0_9, %c0_10] : memref<2x256x128xbf16, #tpu.memory_space<vmem>>, vector<1x256x128xbf16>
    %9 = vector.shape_cast %8 : vector<1x256x128xbf16> to vector<256x128xbf16>
    %cst_11 = arith.constant dense<0.000000e+00> : vector<24x128xf32>
    %10 = tpu.matmul %6, %9, %cst_11 {dimension_numbers = #tpu.dot_dimension_numbers<[1], [0], [0], [1], [0, 0, 1, 1], [], []>} : vector<24x256xbf16>, vector<256x128xbf16>, vector<24x128xf32> -> vector<24x128xf32>
    %c1 = arith.constant 1 : index
    %c0_12 = arith.constant 0 : index
    %c0_13 = arith.constant 0 : index
    %11 = vector.load %arg2[%c1, %c0_12, %c0_13] : memref<2x256x128xbf16, #tpu.memory_space<vmem>>, vector<1x256x128xbf16>
    %12 = vector.shape_cast %11 : vector<1x256x128xbf16> to vector<256x128xbf16>
    %cst_14 = arith.constant dense<0.000000e+00> : vector<24x128xf32>
    %13 = tpu.matmul %7, %12, %cst_14 {dimension_numbers = #tpu.dot_dimension_numbers<[1], [0], [0], [1], [0, 0, 1, 1], [], []>} : vector<24x256xbf16>, vector<256x128xbf16>, vector<24x128xf32> -> vector<24x128xf32>
    %14 = arith.addf %10, %13 : vector<24x128xf32>
    %c0_15 = arith.constant 0 : index
    %c0_16 = arith.constant 0 : index
    %15 = vector.load %arg3[%c0_15, %c0_16] : memref<1x128xf32, #tpu.memory_space<vmem>>, vector<1x128xf32>
    %16 = vector.broadcast %15 : vector<1x128xf32> to vector<24x128xf32>
    %17 = arith.addf %14, %16 : vector<24x128xf32>
    %cst_17 = arith.constant 0.000000e+00 : f32
    %18 = vector.broadcast %cst_17 : f32 to vector<24x128xf32>
    %19 = arith.maximumf %17, %18 : vector<24x128xf32>
    %20 = vector.extract_strided_slice %19 {offsets = [0, 0], sizes = [2, 128], strides = [1, 1]} : vector<24x128xf32> to vector<2x128xf32>
    %21 = vector.extract_strided_slice %19 {offsets = [4, 0], sizes = [2, 128], strides = [1, 1]} : vector<24x128xf32> to vector<2x128xf32>
    %22 = vector.extract_strided_slice %19 {offsets = [8, 0], sizes = [2, 128], strides = [1, 1]} : vector<24x128xf32> to vector<2x128xf32>
    %23 = vector.extract_strided_slice %19 {offsets = [12, 0], sizes = [2, 128], strides = [1, 1]} : vector<24x128xf32> to vector<2x128xf32>
    %24 = vector.extract_strided_slice %19 {offsets = [16, 0], sizes = [2, 128], strides = [1, 1]} : vector<24x128xf32> to vector<2x128xf32>
    %25 = vector.extract_strided_slice %19 {offsets = [20, 0], sizes = [2, 128], strides = [1, 1]} : vector<24x128xf32> to vector<2x128xf32>
    %26 = tpu.concatenate %20, %21, %22, %23, %24, %25 in 0 : vector<2x128xf32>, vector<2x128xf32>, vector<2x128xf32>, vector<2x128xf32>, vector<2x128xf32>, vector<2x128xf32> -> vector<12x128xf32>
    %27 = vector.extract_strided_slice %19 {offsets = [2, 0], sizes = [2, 128], strides = [1, 1]} : vector<24x128xf32> to vector<2x128xf32>
    %28 = vector.extract_strided_slice %19 {offsets = [6, 0], sizes = [2, 128], strides = [1, 1]} : vector<24x128xf32> to vector<2x128xf32>
    %29 = vector.extract_strided_slice %19 {offsets = [10, 0], sizes = [2, 128], strides = [1, 1]} : vector<24x128xf32> to vector<2x128xf32>
    %30 = vector.extract_strided_slice %19 {offsets = [14, 0], sizes = [2, 128], strides = [1, 1]} : vector<24x128xf32> to vector<2x128xf32>
    %31 = vector.extract_strided_slice %19 {offsets = [18, 0], sizes = [2, 128], strides = [1, 1]} : vector<24x128xf32> to vector<2x128xf32>
    %32 = vector.extract_strided_slice %19 {offsets = [22, 0], sizes = [2, 128], strides = [1, 1]} : vector<24x128xf32> to vector<2x128xf32>
    %33 = tpu.concatenate %27, %28, %29, %30, %31, %32 in 0 : vector<2x128xf32>, vector<2x128xf32>, vector<2x128xf32>, vector<2x128xf32>, vector<2x128xf32>, vector<2x128xf32> -> vector<12x128xf32>
    %34 = arith.truncf %26 : vector<12x128xf32> to vector<12x128xbf16>
    %c0_18 = arith.constant 0 : index
    %c128_19 = arith.constant 128 : index
    %35 = vector.load %arg11[%c0_18, %c128_19] : memref<14x256xbf16, #tpu.memory_space<vmem>>, vector<12x128xbf16>
    tpu.vector_store %arg11[%c0_18, %c128_19], %34 {strides = array<i32>} : memref<14x256xbf16, #tpu.memory_space<vmem>>, vector<12x128xbf16>,
    %36 = arith.truncf %33 : vector<12x128xf32> to vector<12x128xbf16>
    %c2_20 = arith.constant 2 : index
    %c0_21 = arith.constant 0 : index
    %37 = vector.load %arg11[%c2_20, %c0_21] : memref<14x256xbf16, #tpu.memory_space<vmem>>, vector<12x128xbf16>
    tpu.vector_store %arg11[%c2_20, %c0_21], %36 {strides = array<i32>} : memref<14x256xbf16, #tpu.memory_space<vmem>>, vector<12x128xbf16>,
    %c0_22 = arith.constant 0 : index
    %c0_23 = arith.constant 0 : index
    %38 = vector.load %arg11[%c0_22, %c0_23] : memref<14x256xbf16, #tpu.memory_space<vmem>>, vector<12x256xbf16>
    %c2_24 = arith.constant 2 : index
    %c0_25 = arith.constant 0 : index
    %39 = vector.load %arg11[%c2_24, %c0_25] : memref<14x256xbf16, #tpu.memory_space<vmem>>, vector<12x256xbf16>
    %c0_26 = arith.constant 0 : index
    %c0_27 = arith.constant 0 : index
    %c0_28 = arith.constant 0 : index
    %40 = vector.load %arg4[%c0_26, %c0_27, %c0_28] : memref<2x256x128xbf16, #tpu.memory_space<vmem>>, vector<1x256x128xbf16>
    %41 = vector.shape_cast %40 : vector<1x256x128xbf16> to vector<256x128xbf16>
    %cst_29 = arith.constant dense<0.000000e+00> : vector<12x128xf32>
    %42 = tpu.matmul %38, %41, %cst_29 {dimension_numbers = #tpu.dot_dimension_numbers<[1], [0], [0], [1], [0, 0, 1, 1], [], []>} : vector<12x256xbf16>, vector<256x128xbf16>, vector<12x128xf32> -> vector<12x128xf32>
    %c1_30 = arith.constant 1 : index
    %c0_31 = arith.constant 0 : index
    %c0_32 = arith.constant 0 : index
    %43 = vector.load %arg4[%c1_30, %c0_31, %c0_32] : memref<2x256x128xbf16, #tpu.memory_space<vmem>>, vector<1x256x128xbf16>
    %44 = vector.shape_cast %43 : vector<1x256x128xbf16> to vector<256x128xbf16>
    %cst_33 = arith.constant dense<0.000000e+00> : vector<12x128xf32>
    %45 = tpu.matmul %39, %44, %cst_33 {dimension_numbers = #tpu.dot_dimension_numbers<[1], [0], [0], [1], [0, 0, 1, 1], [], []>} : vector<12x256xbf16>, vector<256x128xbf16>, vector<12x128xf32> -> vector<12x128xf32>
    %46 = arith.addf %42, %45 : vector<12x128xf32>
    %c0_34 = arith.constant 0 : index
    %c0_35 = arith.constant 0 : index
    %47 = vector.load %arg5[%c0_34, %c0_35] : memref<1x128xf32, #tpu.memory_space<vmem>>, vector<1x128xf32>
    %48 = vector.broadcast %47 : vector<1x128xf32> to vector<12x128xf32>
    %49 = arith.addf %46, %48 : vector<12x128xf32>
    %cst_36 = arith.constant 0.000000e+00 : f32
    %50 = vector.broadcast %cst_36 : f32 to vector<12x128xf32>
    %51 = arith.maximumf %49, %50 : vector<12x128xf32>
    %52 = vector.extract_strided_slice %51 {offsets = [0, 0], sizes = [2, 128], strides = [1, 1]} : vector<12x128xf32> to vector<2x128xf32>
    %53 = vector.extract_strided_slice %51 {offsets = [4, 0], sizes = [2, 128], strides = [1, 1]} : vector<12x128xf32> to vector<2x128xf32>
    %54 = vector.extract_strided_slice %51 {offsets = [8, 0], sizes = [2, 128], strides = [1, 1]} : vector<12x128xf32> to vector<2x128xf32>
    %55 = tpu.concatenate %52, %53, %54 in 0 : vector<2x128xf32>, vector<2x128xf32>, vector<2x128xf32> -> vector<6x128xf32>
    %56 = vector.extract_strided_slice %51 {offsets = [2, 0], sizes = [2, 128], strides = [1, 1]} : vector<12x128xf32> to vector<2x128xf32>
    %57 = vector.extract_strided_slice %51 {offsets = [6, 0], sizes = [2, 128], strides = [1, 1]} : vector<12x128xf32> to vector<2x128xf32>
    %58 = vector.extract_strided_slice %51 {offsets = [10, 0], sizes = [2, 128], strides = [1, 1]} : vector<12x128xf32> to vector<2x128xf32>
    %59 = tpu.concatenate %56, %57, %58 in 0 : vector<2x128xf32>, vector<2x128xf32>, vector<2x128xf32> -> vector<6x128xf32>
    %60 = arith.truncf %55 : vector<6x128xf32> to vector<6x128xbf16>
    %c0_37 = arith.constant 0 : index
    %c128_38 = arith.constant 128 : index
    %61 = vector.load %arg12[%c0_37, %c128_38] : memref<8x256xbf16, #tpu.memory_space<vmem>>, vector<6x128xbf16>
    tpu.vector_store %arg12[%c0_37, %c128_38], %60 {strides = array<i32>} : memref<8x256xbf16, #tpu.memory_space<vmem>>, vector<6x128xbf16>,
    %62 = arith.truncf %59 : vector<6x128xf32> to vector<6x128xbf16>
    %c2_39 = arith.constant 2 : index
    %c0_40 = arith.constant 0 : index
    %63 = vector.load %arg12[%c2_39, %c0_40] : memref<8x256xbf16, #tpu.memory_space<vmem>>, vector<6x128xbf16>
    tpu.vector_store %arg12[%c2_39, %c0_40], %62 {strides = array<i32>} : memref<8x256xbf16, #tpu.memory_space<vmem>>, vector<6x128xbf16>,
    %c0_41 = arith.constant 0 : index
    %c0_42 = arith.constant 0 : index
    %64 = vector.load %arg12[%c0_41, %c0_42] : memref<8x256xbf16, #tpu.memory_space<vmem>>, vector<6x256xbf16>
    %c2_43 = arith.constant 2 : index
    %c0_44 = arith.constant 0 : index
    %65 = vector.load %arg12[%c2_43, %c0_44] : memref<8x256xbf16, #tpu.memory_space<vmem>>, vector<6x256xbf16>
    %c0_45 = arith.constant 0 : index
    %c0_46 = arith.constant 0 : index
    %c0_47 = arith.constant 0 : index
    %66 = vector.load %arg6[%c0_45, %c0_46, %c0_47] : memref<2x256x128xbf16, #tpu.memory_space<vmem>>, vector<1x256x128xbf16>
    %67 = vector.shape_cast %66 : vector<1x256x128xbf16> to vector<256x128xbf16>
    %cst_48 = arith.constant dense<0.000000e+00> : vector<6x128xf32>
    %68 = tpu.matmul %64, %67, %cst_48 {dimension_numbers = #tpu.dot_dimension_numbers<[1], [0], [0], [1], [0, 0, 1, 1], [], []>} : vector<6x256xbf16>, vector<256x128xbf16>, vector<6x128xf32> -> vector<6x128xf32>
    %c1_49 = arith.constant 1 : index
    %c0_50 = arith.constant 0 : index
    %c0_51 = arith.constant 0 : index
    %69 = vector.load %arg6[%c1_49, %c0_50, %c0_51] : memref<2x256x128xbf16, #tpu.memory_space<vmem>>, vector<1x256x128xbf16>
    %70 = vector.shape_cast %69 : vector<1x256x128xbf16> to vector<256x128xbf16>
    %cst_52 = arith.constant dense<0.000000e+00> : vector<6x128xf32>
    %71 = tpu.matmul %65, %70, %cst_52 {dimension_numbers = #tpu.dot_dimension_numbers<[1], [0], [0], [1], [0, 0, 1, 1], [], []>} : vector<6x256xbf16>, vector<256x128xbf16>, vector<6x128xf32> -> vector<6x128xf32>
    %72 = arith.addf %68, %71 : vector<6x128xf32>
    %c0_53 = arith.constant 0 : index
    %c0_54 = arith.constant 0 : index
    %73 = vector.load %arg7[%c0_53, %c0_54] : memref<1x128xf32, #tpu.memory_space<vmem>>, vector<1x128xf32>
    %74 = vector.broadcast %73 : vector<1x128xf32> to vector<6x128xf32>
    %75 = arith.addf %72, %74 : vector<6x128xf32>
    %cst_55 = arith.constant 0.000000e+00 : f32
    %76 = vector.broadcast %cst_55 : f32 to vector<6x128xf32>
    %77 = arith.maximumf %75, %76 : vector<6x128xf32>
    %78 = vector.extract_strided_slice %77 {offsets = [0, 0], sizes = [2, 128], strides = [1, 1]} : vector<6x128xf32> to vector<2x128xf32>
    %79 = vector.extract_strided_slice %77 {offsets = [2, 0], sizes = [2, 128], strides = [1, 1]} : vector<6x128xf32> to vector<2x128xf32>
    %80 = vector.extract_strided_slice %77 {offsets = [4, 0], sizes = [2, 128], strides = [1, 1]} : vector<6x128xf32> to vector<2x128xf32>
    %81 = tpu.concatenate %78, %79, %80 in 1 : vector<2x128xf32>, vector<2x128xf32>, vector<2x128xf32> -> vector<2x384xf32>
    %82 = arith.truncf %81 : vector<2x384xf32> to vector<2x384xbf16>
    %c0_56 = arith.constant 0 : index
    %c0_57 = arith.constant 0 : index
    %83 = vector.load %arg8[%c0_56, %c0_57] : memref<384x128xbf16, #tpu.memory_space<vmem>>, vector<384x128xbf16>
    %cst_58 = arith.constant dense<0.000000e+00> : vector<2x128xf32>
    %84 = tpu.matmul %82, %83, %cst_58 {dimension_numbers = #tpu.dot_dimension_numbers<[1], [0], [0], [1], [0, 0, 1, 1], [], []>} : vector<2x384xbf16>, vector<384x128xbf16>, vector<2x128xf32> -> vector<2x128xf32>
    %c0_59 = arith.constant 0 : index
    %c0_60 = arith.constant 0 : index
    %85 = vector.load %arg9[%c0_59, %c0_60] : memref<1x128xf32, #tpu.memory_space<vmem>>, vector<1x128xf32>
    %86 = vector.broadcast %85 : vector<1x128xf32> to vector<2x128xf32>
    %87 = arith.addf %84, %86 : vector<2x128xf32>
    %c0_61 = arith.constant 0 : index
    %c0_62 = arith.constant 0 : index
    %88 = vector.load %arg10[%c0_61, %c0_62] : memref<2x128xf32, #tpu.memory_space<vmem>>, vector<2x128xf32>
    tpu.vector_store %arg10[%c0_61, %c0_62], %87 {strides = array<i32>} : memref<2x128xf32, #tpu.memory_space<vmem>>, vector<2x128xf32>,
    return
  }
  func.func @transform_0(%arg0: i32) -> (i32, i32) {
    %c0_i32 = arith.constant 0 : i32
    %c0_i32_0 = arith.constant 0 : i32
    %c0_i32_1 = arith.constant 0 : i32
    return %c0_i32, %c0_i32_0 : i32, i32
  }
  func.func @transform_1(%arg0: i32) -> (i32, i32, i32) {
    %c0_i32 = arith.constant 0 : i32
    %c0_i32_0 = arith.constant 0 : i32
    %c0_i32_1 = arith.constant 0 : i32
    %c0_i32_2 = arith.constant 0 : i32
    return %c0_i32, %c0_i32_0, %c0_i32_1 : i32, i32, i32
  }
  func.func @transform_2(%arg0: i32) -> (i32, i32) {
    %c0_i32 = arith.constant 0 : i32
    %c0_i32_0 = arith.constant 0 : i32
    %c0_i32_1 = arith.constant 0 : i32
    return %c0_i32, %c0_i32_0 : i32, i32
  }
  func.func @transform_3(%arg0: i32) -> (i32, i32, i32) {
    %c0_i32 = arith.constant 0 : i32
    %c0_i32_0 = arith.constant 0 : i32
    %c0_i32_1 = arith.constant 0 : i32
    %c0_i32_2 = arith.constant 0 : i32
    return %c0_i32, %c0_i32_0, %c0_i32_1 : i32, i32, i32
  }
  func.func @transform_4(%arg0: i32) -> (i32, i32) {
    %c0_i32 = arith.constant 0 : i32
    %c0_i32_0 = arith.constant 0 : i32
    %c0_i32_1 = arith.constant 0 : i32
    return %c0_i32, %c0_i32_0 : i32, i32
  }
  func.func @transform_5(%arg0: i32) -> (i32, i32, i32) {
    %c0_i32 = arith.constant 0 : i32
    %c0_i32_0 = arith.constant 0 : i32
    %c0_i32_1 = arith.constant 0 : i32
    %c0_i32_2 = arith.constant 0 : i32
    return %c0_i32, %c0_i32_0, %c0_i32_1 : i32, i32, i32
  }
  func.func @transform_6(%arg0: i32) -> (i32, i32) {
    %c0_i32 = arith.constant 0 : i32
    %c0_i32_0 = arith.constant 0 : i32
    %c0_i32_1 = arith.constant 0 : i32
    return %c0_i32, %c0_i32_0 : i32, i32
  }
  func.func @transform_7(%arg0: i32) -> (i32, i32) {
    %c0_i32 = arith.constant 0 : i32
    %c0_i32_0 = arith.constant 0 : i32
    %c0_i32_1 = arith.constant 0 : i32
    return %c0_i32, %c0_i32_0 : i32, i32
  }
  func.func @transform_8(%arg0: i32) -> (i32, i32) {
    %c0_i32 = arith.constant 0 : i32
    %c0_i32_0 = arith.constant 0 : i32
    %c0_i32_1 = arith.constant 0 : i32
    return %c0_i32, %c0_i32_0 : i32, i32
  }
  func.func @transform_9(%arg0: i32) -> (i32, i32) {
    %c0_i32 = arith.constant 0 : i32
    %c0_i32_0 = arith.constant 0 : i32
    %c0_i32_1 = arith.constant 0 : i32
    return %c0_i32, %c0_i32_0 : i32, i32
  }
}

</mosaic_0001>

<llo_original>
// kernel: encoder_forward.1
$region0: #{encoder_forward.1}
  #allocation0 [shape = 'u32[]', space=smem, size = 0x4, offset = 0x4, fixed_abs, tag = 'smem constant byte address 0x4 - core index']
  #allocation1 [shape = 'u32[144,128]{1,0:T(1,128)}', space=vmem, size = 0x12000, scoped, tag = 'internal scratch']
  #allocation2 [shape = 'bf16[14,256]{1,0:T(8,128)(2,1)}', space=vmem, size = 0x2000, scoped, tag = 'scratch operand']
  #allocation3 [shape = 'bf16[8,256]{1,0:T(8,128)(2,1)}', space=vmem, size = 0x1000, scoped, tag = 'scratch operand']
  %s0 = inlined_call_operand.vmem [shape: bf16[26,256], index: 0, kind: input, shape index: {}]
  %s1 = inlined_call_operand.vmem [shape: bf16[2,256,128], index: 1, kind: input, shape index: {}]
  %s2 = inlined_call_operand.vmem [shape: f32[1,128], index: 2, kind: input, shape index: {}]
  %s3 = inlined_call_operand.vmem [shape: bf16[2,256,128], index: 3, kind: input, shape index: {}]
  %s4 = inlined_call_operand.vmem [shape: f32[1,128], index: 4, kind: input, shape index: {}]
  %s5 = inlined_call_operand.vmem [shape: bf16[2,256,128], index: 5, kind: input, shape index: {}]
  %s6 = inlined_call_operand.vmem [shape: f32[1,128], index: 6, kind: input, shape index: {}]
  %s7 = inlined_call_operand.vmem [shape: bf16[384,128], index: 7, kind: input, shape index: {}]
  %s8 = inlined_call_operand.vmem [shape: f32[1,128], index: 8, kind: input, shape index: {}]
  %s9 = inlined_call_operand.hbm [shape: f32[2,128], index: 9, kind: output, shape index: {}]
  %s10 = sld [smem:[#allocation0]]
  $region46: #{encoder_forward.1} parent=0
    _
  %s12 = ssub.s32 1, %s10
  %s13 = scalar_select 0, %s12, %s10
  $region1: #{encoder_forward.1} parent=0
    #allocation4 [shape = 'u8[1024]{0}', space=vmem, size = 0x400, scoped, tag = 'output window, operand 0, single buffered']
    #allocation5 [shape = 's32[1]{0}', space=sflag, size = 0x4, scoped, tag = 'scoped memory for encoder_forward.1']
    %14 = vsyncpa [#allocation5], 0
    // Predicated region
    $region2: #{encoder_forward.1} parent=1 // pred_check
      _
    $region3: #{encoder_forward.1} parent=1 // pred_check_branch
      %16 = sbr.rel (0) target = $region5
    $region4: #{encoder_forward.1} parent=1 // pred_region
      _
    $region5: #{encoder_forward.1} parent=1 // pred_fallthru
      _
    // Predicated region
    $region6: #{encoder_forward.1} parent=1 // pred_check
      _
    $region7: #{encoder_forward.1} parent=1 // pred_check_branch
      %18 = sbr.rel (0) target = $region9
    $region8: #{encoder_forward.1} parent=1 // pred_region
      _
    $region9: #{encoder_forward.1} parent=1 // pred_fallthru
      _
    // Predicated region
    $region10: #{encoder_forward.1} parent=1 // pred_check
      _
    $region11: #{encoder_forward.1} parent=1 // pred_check_branch
      %20 = sbr.rel (0) target = $region13
    $region12: #{encoder_forward.1} parent=1 // pred_region
      _
    $region13: #{encoder_forward.1} parent=1 // pred_fallthru
      _
    // Predicated region
    $region14: #{encoder_forward.1} parent=1 // pred_check
      _
    $region15: #{encoder_forward.1} parent=1 // pred_check_branch
      %22 = sbr.rel (0) target = $region17
    $region16: #{encoder_forward.1} parent=1 // pred_region
      _
    $region17: #{encoder_forward.1} parent=1 // pred_fallthru
      _
    // Predicated region
    $region18: #{encoder_forward.1} parent=1 // pred_check
      _
    $region19: #{encoder_forward.1} parent=1 // pred_check_branch
      %24 = sbr.rel (0) target = $region21
    $region20: #{encoder_forward.1} parent=1 // pred_region
      _
    $region21: #{encoder_forward.1} parent=1 // pred_fallthru
      _
    // Predicated region
    $region22: #{encoder_forward.1} parent=1 // pred_check
      _
    $region23: #{encoder_forward.1} parent=1 // pred_check_branch
      %26 = sbr.rel (0) target = $region25
    $region24: #{encoder_forward.1} parent=1 // pred_region
      _
    $region25: #{encoder_forward.1} parent=1 // pred_fallthru
      _
    // Predicated region
    $region26: #{encoder_forward.1} parent=1 // pred_check
      _
    $region27: #{encoder_forward.1} parent=1 // pred_check_branch
      %28 = sbr.rel (0) target = $region29
    $region28: #{encoder_forward.1} parent=1 // pred_region
      _
    $region29: #{encoder_forward.1} parent=1 // pred_fallthru
      _
    // Predicated region
    $region30: #{encoder_forward.1} parent=1 // pred_check
      _
    $region31: #{encoder_forward.1} parent=1 // pred_check_branch
      %30 = sbr.rel (0) target = $region33
    $region32: #{encoder_forward.1} parent=1 // pred_region
      _
    $region33: #{encoder_forward.1} parent=1 // pred_fallthru
      _
    // Predicated region
    $region34: #{encoder_forward.1} parent=1 // pred_check
      _
    $region35: #{encoder_forward.1} parent=1 // pred_check_branch
      %32 = sbr.rel (0) target = $region37
    $region36: #{encoder_forward.1} parent=1 // pred_region
      _
    $region37: #{encoder_forward.1} parent=1 // pred_fallthru
      _
    %34 = vst [vmem:[#allocation2] sm:$0x1] 0
    %35 = vst [vmem:[#allocation2 + $0xc] sm:$0x4] 0
    %36 = vst [vmem:[#allocation3] sm:$0x1] 0
    %37 = vst [vmem:[#allocation3 + $0x4] sm:$0x8] 0
    %v38 = vld [vmem:[%s0] sm:$0xff]
    %v39 = vld [vmem:[%s0 + $0x8] sm:$0xff]
    %v40 = vld [vmem:[%s0 + $0x10] sm:$0xff]
    %v41 = vld [vmem:[%s0] sm:$0xee]
    %v42 = vld [vmem:[%s0 + $0x18] sm:$0x11]
    %v43 = vld [vmem:[%s1] sm:$0xf]
    %v44 = vld [vmem:[%s1 + $0x4] sm:$0xf]
    %v45 = vld [vmem:[%s1 + $0x8] sm:$0xf]
    %v46 = vld [vmem:[%s1 + $0xc] sm:$0xf]
    %v47 = vld [vmem:[%s1 + $0x10] sm:$0xf]
    %v48 = vld [vmem:[%s1 + $0x14] sm:$0xf]
    %v49 = vld [vmem:[%s1 + $0x18] sm:$0xf]
    %v50 = vld [vmem:[%s1 + $0x1c] sm:$0xf]
    %v51 = vld [vmem:[%s1 + $0x20] sm:$0xf]
    %v52 = vld [vmem:[%s1 + $0x24] sm:$0xf]
    %v53 = vld [vmem:[%s1 + $0x28] sm:$0xf]
    %v54 = vld [vmem:[%s1 + $0x2c] sm:$0xf]
    %v55 = vld [vmem:[%s1 + $0x30] sm:$0xf]
    %v56 = vld [vmem:[%s1 + $0x34] sm:$0xf]
    %v57 = vld [vmem:[%s1 + $0x38] sm:$0xf]
    %v58 = vld [vmem:[%s1 + $0x3c] sm:$0xf]
    %v59 = vld [vmem:[%s1 + $0x40] sm:$0xf]
    %v60 = vld [vmem:[%s1 + $0x44] sm:$0xf]
    %v61 = vld [vmem:[%s1 + $0x48] sm:$0xf]
    %v62 = vld [vmem:[%s1 + $0x4c] sm:$0xf]
    %v63 = vld [vmem:[%s1 + $0x50] sm:$0xf]
    %v64 = vld [vmem:[%s1 + $0x54] sm:$0xf]
    %v65 = vld [vmem:[%s1 + $0x58] sm:$0xf]
    %v66 = vld [vmem:[%s1 + $0x5c] sm:$0xf]
    %v67 = vld [vmem:[%s1 + $0x60] sm:$0xf]
    %v68 = vld [vmem:[%s1 + $0x64] sm:$0xf]
    %v69 = vld [vmem:[%s1 + $0x68] sm:$0xf]
    %v70 = vld [vmem:[%s1 + $0x6c] sm:$0xf]
    %v71 = vld [vmem:[%s1 + $0x70] sm:$0xf]
    %v72 = vld [vmem:[%s1 + $0x74] sm:$0xf]
    %v73 = vld [vmem:[%s1 + $0x78] sm:$0xf]
    %v74 = vld [vmem:[%s1 + $0x7c] sm:$0xf]
    %s75 = scalar_lea.vmem %s1, 128
    %v76 = vld [vmem:[%s75] sm:$0xf]
    %v77 = vld [vmem:[%s75 + $0x4] sm:$0xf]
    %v78 = vld [vmem:[%s75 + $0x8] sm:$0xf]
    %v79 = vld [vmem:[%s75 + $0xc] sm:$0xf]
    %v80 = vld [vmem:[%s75 + $0x10] sm:$0xf]
    %v81 = vld [vmem:[%s75 + $0x14] sm:$0xf]
    %v82 = vld [vmem:[%s75 + $0x18] sm:$0xf]
    %v83 = vld [vmem:[%s75 + $0x1c] sm:$0xf]
    %v84 = vld [vmem:[%s75 + $0x20] sm:$0xf]
    %v85 = vld [vmem:[%s75 + $0x24] sm:$0xf]
    %v86 = vld [vmem:[%s75 + $0x28] sm:$0xf]
    %v87 = vld [vmem:[%s75 + $0x2c] sm:$0xf]
    %v88 = vld [vmem:[%s75 + $0x30] sm:$0xf]
    %v89 = vld [vmem:[%s75 + $0x34] sm:$0xf]
    %v90 = vld [vmem:[%s75 + $0x38] sm:$0xf]
    %v91 = vld [vmem:[%s75 + $0x3c] sm:$0xf]
    %v92 = vld [vmem:[%s75 + $0x40] sm:$0xf]
    %v93 = vld [vmem:[%s75 + $0x44] sm:$0xf]
    %v94 = vld [vmem:[%s75 + $0x48] sm:$0xf]
    %v95 = vld [vmem:[%s75 + $0x4c] sm:$0xf]
    %v96 = vld [vmem:[%s75 + $0x50] sm:$0xf]
    %v97 = vld [vmem:[%s75 + $0x54] sm:$0xf]
    %v98 = vld [vmem:[%s75 + $0x58] sm:$0xf]
    %v99 = vld [vmem:[%s75 + $0x5c] sm:$0xf]
    %v100 = vld [vmem:[%s75 + $0x60] sm:$0xf]
    %v101 = vld [vmem:[%s75 + $0x64] sm:$0xf]
    %v102 = vld [vmem:[%s75 + $0x68] sm:$0xf]
    %v103 = vld [vmem:[%s75 + $0x6c] sm:$0xf]
    %v104 = vld [vmem:[%s75 + $0x70] sm:$0xf]
    %v105 = vld [vmem:[%s75 + $0x74] sm:$0xf]
    %v106 = vld [vmem:[%s75 + $0x78] sm:$0xf]
    %v107 = vld [vmem:[%s75 + $0x7c] sm:$0xf]
    %v112 = vunpack.c.l.b16 %v41
    %v113 = vunpack.c.h.b16 %v41
    %v114 = vunpack.c.l.b16 %v39
    %v115 = vunpack.c.h.b16 %v39
    %v116 = vunpack.c.l.b16 %v40
    %v117 = vunpack.c.h.b16 %v40
    %v118 = vunpack.c.l.b16 %v42
    %v119 = vunpack.c.h.b16 %v42
    %v120 = vpack.c.b16 %v114, %v112
    %v121 = vpack.c.b16 %v115, %v113
    %v122 = vpack.c.b16 %v118, %v116
    %v123 = vpack.c.b16 %v119, %v117
    %vm124 = vcmask 1046528
    %v125 = vrot.slane %v120, 1
    %v126 = vrot.slane %v122, 1
    %v127 = vsel %vm124, %v125, %v126
    %v128 = vrot.slane %v121, 1
    %v129 = vrot.slane %v123, 1
    %v130 = vsel %vm124, %v128, %v129
    %v167 = vunpack.c.l.b16 %v76
    %v168 = vunpack.c.l.b16 %v77
    %v169 = vunpack.c.l.b16 %v78
    %v170 = vunpack.c.l.b16 %v79
    %v171 = vunpack.c.l.b16 %v80
    %v172 = vunpack.c.l.b16 %v81
    %v173 = vunpack.c.l.b16 %v82
    %v174 = vunpack.c.l.b16 %v83
    %v175 = vunpack.c.l.b16 %v84
    %v176 = vunpack.c.l.b16 %v85
    %v177 = vunpack.c.l.b16 %v86
    %v178 = vunpack.c.l.b16 %v87
    %v179 = vunpack.c.l.b16 %v88
    %v180 = vunpack.c.l.b16 %v89
    %v181 = vunpack.c.l.b16 %v90
    %v182 = vunpack.c.l.b16 %v91
    %v183 = vunpack.c.l.b16 %v92
    %v184 = vunpack.c.l.b16 %v93
    %v185 = vunpack.c.l.b16 %v94
    %v186 = vunpack.c.l.b16 %v95
    %v187 = vunpack.c.l.b16 %v96
    %v188 = vunpack.c.l.b16 %v97
    %v189 = vunpack.c.l.b16 %v98
    %v190 = vunpack.c.l.b16 %v99
    %v191 = vunpack.c.l.b16 %v100
    %v192 = vunpack.c.l.b16 %v101
    %v193 = vunpack.c.l.b16 %v102
    %v194 = vunpack.c.l.b16 %v103
    %v195 = vunpack.c.l.b16 %v104
    %v196 = vunpack.c.l.b16 %v105
    %v197 = vunpack.c.l.b16 %v106
    %v198 = vunpack.c.l.b16 %v107
    %v199 = vpack.c.b16 %v168, %v167
    %v200 = vpack.c.b16 %v170, %v169
    %v201 = vpack.c.b16 %v172, %v171
    %v202 = vpack.c.b16 %v174, %v173
    %v203 = vpack.c.b16 %v176, %v175
    %v204 = vpack.c.b16 %v178, %v177
    %v205 = vpack.c.b16 %v180, %v179
    %v206 = vpack.c.b16 %v182, %v181
    %v207 = vpack.c.b16 %v184, %v183
    %v208 = vpack.c.b16 %v186, %v185
    %v209 = vpack.c.b16 %v188, %v187
    %v210 = vpack.c.b16 %v190, %v189
    %v211 = vpack.c.b16 %v192, %v191
    %v212 = vpack.c.b16 %v194, %v193
    %v213 = vpack.c.b16 %v196, %v195
    %v214 = vpack.c.b16 %v198, %v197
    %231 = vmatprep.subr.bf16.mxu0 0
    %232 = vmatpush1.bf16.msra.mxu0 %v199
    %233 = vmatprep.subr.bf16.mxu0 0
    %234 = vmatpush1.bf16.msra.mxu0 %v200
    %235 = vmatprep.subr.bf16.mxu0 0
    %236 = vmatpush1.bf16.msra.mxu0 %v201
    %237 = vmatprep.subr.bf16.mxu0 0
    %238 = vmatpush1.bf16.msra.mxu0 %v202
    %239 = vmatprep.subr.bf16.mxu0 0
    %240 = vmatpush1.bf16.msra.mxu0 %v203
    %241 = vmatprep.subr.bf16.mxu0 0
    %242 = vmatpush1.bf16.msra.mxu0 %v204
    %243 = vmatprep.subr.bf16.mxu0 0
    %244 = vmatpush1.bf16.msra.mxu0 %v205
    %245 = vmatprep.subr.bf16.mxu0 0
    %246 = vmatpush1.bf16.msra.mxu0 %v206
    %247 = vmatprep.subr.bf16.mxu0 0
    %248 = vmatpush1.bf16.msra.mxu0 %v207
    %249 = vmatprep.subr.bf16.mxu0 0
    %250 = vmatpush1.bf16.msra.mxu0 %v208
    %251 = vmatprep.subr.bf16.mxu0 0
    %252 = vmatpush1.bf16.msra.mxu0 %v209
    %253 = vmatprep.subr.bf16.mxu0 0
    %254 = vmatpush1.bf16.msra.mxu0 %v210
    %255 = vmatprep.subr.bf16.mxu0 0
    %256 = vmatpush1.bf16.msra.mxu0 %v211
    %257 = vmatprep.subr.bf16.mxu0 0
    %258 = vmatpush1.bf16.msra.mxu0 %v212
    %259 = vmatprep.subr.bf16.mxu0 0
    %260 = vmatpush1.bf16.msra.mxu0 %v213
    %261 = vmatprep.subr.bf16.mxu0 0
    %262 = vmatpush1.bf16.msra.mxu0 %v214
    %263 = vmatprep.mubr.bf16.mxu0 %v130
    %264 = vmatmul.mubr.bf16.gmra.mrb[0].mxu0 %v127
    %v265 = vpop.f32.mrb[0].mxu0
    %v266 = vadd.f32 0.0, %v265
    %v267 = vpop.f32.mrb[0].mxu0
    %v268 = vpop.f32.mrb[0].mxu0
    %v269 = vadd.f32 0.0, %v268
    %v270 = vpop.f32.mrb[0].mxu0
    %271 = vmatprep.mubr.bf16.mxu0 %v129
    %272 = vmatmul.mubr.bf16.gmra.mrb[0].mxu0 %v126
    %v273 = vpop.f32.mrb[0].mxu0
    %v274 = vadd.f32 0.0, %v273
    %v275 = vpop.f32.mrb[0].mxu0
    %v276 = vpop.f32.mrb[0].mxu0
    %v277 = vpop.f32.mrb[0].mxu0
    %278 = vdwg.mxu0
    %v280 = vunpack.c.l.b16 %v38
    %v281 = vunpack.c.h.b16 %v38
    %v282 = vpack.c.b16 %v114, %v280
    %v283 = vpack.c.b16 %v115, %v281
    %v284 = vpack.c.b16 %v116, %v116
    %v285 = vpack.c.b16 %v117, %v117
    %v322 = vunpack.c.l.b16 %v43
    %v323 = vunpack.c.l.b16 %v44
    %v324 = vunpack.c.l.b16 %v45
    %v325 = vunpack.c.l.b16 %v46
    %v326 = vunpack.c.l.b16 %v47
    %v327 = vunpack.c.l.b16 %v48
    %v328 = vunpack.c.l.b16 %v49
    %v329 = vunpack.c.l.b16 %v50
    %v330 = vunpack.c.l.b16 %v51
    %v331 = vunpack.c.l.b16 %v52
    %v332 = vunpack.c.l.b16 %v53
    %v333 = vunpack.c.l.b16 %v54
    %v334 = vunpack.c.l.b16 %v55
    %v335 = vunpack.c.l.b16 %v56
    %v336 = vunpack.c.l.b16 %v57
    %v337 = vunpack.c.l.b16 %v58
    %v338 = vunpack.c.l.b16 %v59
    %v339 = vunpack.c.l.b16 %v60
    %v340 = vunpack.c.l.b16 %v61
    %v341 = vunpack.c.l.b16 %v62
    %v342 = vunpack.c.l.b16 %v63
    %v343 = vunpack.c.l.b16 %v64
    %v344 = vunpack.c.l.b16 %v65
    %v345 = vunpack.c.l.b16 %v66
    %v346 = vunpack.c.l.b16 %v67
    %v347 = vunpack.c.l.b16 %v68
    %v348 = vunpack.c.l.b16 %v69
    %v349 = vunpack.c.l.b16 %v70
    %v350 = vunpack.c.l.b16 %v71
    %v351 = vunpack.c.l.b16 %v72
    %v352 = vunpack.c.l.b16 %v73
    %v353 = vunpack.c.l.b16 %v74
    %v354 = vpack.c.b16 %v323, %v322
    %v355 = vpack.c.b16 %v325, %v324
    %v356 = vpack.c.b16 %v327, %v326
    %v357 = vpack.c.b16 %v329, %v328
    %v358 = vpack.c.b16 %v331, %v330
    %v359 = vpack.c.b16 %v333, %v332
    %v360 = vpack.c.b16 %v335, %v334
    %v361 = vpack.c.b16 %v337, %v336
    %v362 = vpack.c.b16 %v339, %v338
    %v363 = vpack.c.b16 %v341, %v340
    %v364 = vpack.c.b16 %v343, %v342
    %v365 = vpack.c.b16 %v345, %v344
    %v366 = vpack.c.b16 %v347, %v346
    %v367 = vpack.c.b16 %v349, %v348
    %v368 = vpack.c.b16 %v351, %v350
    %v369 = vpack.c.b16 %v353, %v352
    %386 = vmatprep.subr.bf16.mxu0 0
    %387 = vmatpush1.bf16.msra.mxu0 %v354
    %388 = vmatprep.subr.bf16.mxu0 0
    %389 = vmatpush1.bf16.msra.mxu0 %v355
    %390 = vmatprep.subr.bf16.mxu0 0
    %391 = vmatpush1.bf16.msra.mxu0 %v356
    %392 = vmatprep.subr.bf16.mxu0 0
    %393 = vmatpush1.bf16.msra.mxu0 %v357
    %394 = vmatprep.subr.bf16.mxu0 0
    %395 = vmatpush1.bf16.msra.mxu0 %v358
    %396 = vmatprep.subr.bf16.mxu0 0
    %397 = vmatpush1.bf16.msra.mxu0 %v359
    %398 = vmatprep.subr.bf16.mxu0 0
    %399 = vmatpush1.bf16.msra.mxu0 %v360
    %400 = vmatprep.subr.bf16.mxu0 0
    %401 = vmatpush1.bf16.msra.mxu0 %v361
    %402 = vmatprep.subr.bf16.mxu0 0
    %403 = vmatpush1.bf16.msra.mxu0 %v362
    %404 = vmatprep.subr.bf16.mxu0 0
    %405 = vmatpush1.bf16.msra.mxu0 %v363
    %406 = vmatprep.subr.bf16.mxu0 0
    %407 = vmatpush1.bf16.msra.mxu0 %v364
    %408 = vmatprep.subr.bf16.mxu0 0
    %409 = vmatpush1.bf16.msra.mxu0 %v365
    %410 = vmatprep.subr.bf16.mxu0 0
    %411 = vmatpush1.bf16.msra.mxu0 %v366
    %412 = vmatprep.subr.bf16.mxu0 0
    %413 = vmatpush1.bf16.msra.mxu0 %v367
    %414 = vmatprep.subr.bf16.mxu0 0
    %415 = vmatpush1.bf16.msra.mxu0 %v368
    %416 = vmatprep.subr.bf16.mxu0 0
    %417 = vmatpush1.bf16.msra.mxu0 %v369
    %418 = vmatprep.mubr.bf16.mxu0 %v283
    %419 = vmatmul.mubr.bf16.gmra.mrb[0].mxu0 %v282
    %v420 = vpop.f32.mrb[0].mxu0
    %v421 = vadd.f32 %v266, %v420
    %v422 = vpop.f32.mrb[0].mxu0
    %v423 = vpop.f32.mrb[0].mxu0
    %v424 = vadd.f32 %v269, %v423
    %v425 = vpop.f32.mrb[0].mxu0
    %426 = vmatprep.mubr.bf16.mxu0 %v285
    %427 = vmatmul.mubr.bf16.gmra.mrb[0].mxu0 %v284
    %v428 = vpop.f32.mrb[0].mxu0
    %v429 = vadd.f32 %v274, %v428
    %v430 = vpop.f32.mrb[0].mxu0
    %v431 = vpop.f32.mrb[0].mxu0
    %v432 = vpop.f32.mrb[0].mxu0
    %433 = vdwg.mxu0
    %v434 = vld [vmem:[%s2] sm:$0x1]
    %v436 = vlaneseq
    %v437 = vshrl.u32 %v436, 7
    %v438 = vsub.s32 0, %v437
    %v439 = vrot.slane %v434, %v438
    %v441 = vadd.f32 %v421, %v439
    %v442 = vadd.f32 %v424, %v439
    %v443 = vadd.f32 %v429, %v439
    %v444 = vmax.f32 %v441, 0.0
    %v445 = vmax.f32 %v442, 0.0
    %v446 = vmax.f32 %v443, 0.0
    %v448 = vrot.slane %v444, 2
    %v451 = vrot.slane %v445, 4
    %v453 = vrot.slane %v445, 6
    %v456 = vrot.slane %v446, 2
    %vm458 = vcmask 1041408
    %v459 = vsel %vm458, %v444, %v448
    %vm460 = vcmask 1043456
    %v461 = vsel %vm460, %v459, %v451
    %vm462 = vcmask 1045504
    %v463 = vsel %vm462, %v461, %v453
    %v464 = vsel %vm458, %v446, %v456
    %v465 = vrot.slane %v444, 4
    %v467 = vrot.slane %v446, 4
    %v469 = vsel %vm458, %v448, %v465
    %v470 = vsel %vm460, %v469, %v453
    %v471 = vsel %vm462, %v470, %v445
    %v472 = vsel %vm458, %v456, %v467
    %v473 = vpack.c.bf16 %v464, %v463
    %v475 = vunpack.c.l.b16 %v473
    %v476 = vunpack.c.h.b16 %v473
    %v477 = vpack.c.b16 %v475, %v475
    %v478 = vpack.c.b16 %v476, %v476
    %481 = vst [vmem:[#allocation2 + $0x4] sm:$0xf] %v477
    %482 = vst [vmem:[#allocation2 + $0xc] sm:$0x3] %v478
    %v483 = vpack.c.bf16 %v472, %v471
    %v485 = vunpack.c.l.b16 %v483
    %v486 = vunpack.c.h.b16 %v483
    %v487 = vpack.c.b16 %v485, %v485
    %v488 = vpack.c.b16 %v486, %v486
    %vm489 = vcmask 1040384
    %vm490 = vcmask 1044484
    %vm491 = vmor %vm489, %vm490
    %v492 = vrot.slane %v487, 7
    %v493 = vrot.slane %v492, 4
    %v494 = vrot.slane %v488, 7
    %v495 = vsel %vm491, %v493, %v494
    %498 = vst [vmem:[#allocation2] sm:$0xe] %v492
    %499 = vst [vmem:[#allocation2 + $0x8] sm:$0x7] %v495
    %v500 = vld [vmem:[#allocation2] sm:$0xff]
    %v501 = vld [vmem:[#allocation2 + $0x8] sm:$0x33]
    %v502 = vld [vmem:[#allocation2] sm:$0xee]
    %v503 = vld [vmem:[#allocation2 + $0x8] sm:$0x77]
    %v504 = vld [vmem:[%s3] sm:$0xf]
    %v505 = vld [vmem:[%s3 + $0x4] sm:$0xf]
    %v506 = vld [vmem:[%s3 + $0x8] sm:$0xf]
    %v507 = vld [vmem:[%s3 + $0xc] sm:$0xf]
    %v508 = vld [vmem:[%s3 + $0x10] sm:$0xf]
    %v509 = vld [vmem:[%s3 + $0x14] sm:$0xf]
    %v510 = vld [vmem:[%s3 + $0x18] sm:$0xf]
    %v511 = vld [vmem:[%s3 + $0x1c] sm:$0xf]
    %v512 = vld [vmem:[%s3 + $0x20] sm:$0xf]
    %v513 = vld [vmem:[%s3 + $0x24] sm:$0xf]
    %v514 = vld [vmem:[%s3 + $0x28] sm:$0xf]
    %v515 = vld [vmem:[%s3 + $0x2c] sm:$0xf]
    %v516 = vld [vmem:[%s3 + $0x30] sm:$0xf]
    %v517 = vld [vmem:[%s3 + $0x34] sm:$0xf]
    %v518 = vld [vmem:[%s3 + $0x38] sm:$0xf]
    %v519 = vld [vmem:[%s3 + $0x3c] sm:$0xf]
    %v520 = vld [vmem:[%s3 + $0x40] sm:$0xf]
    %v521 = vld [vmem:[%s3 + $0x44] sm:$0xf]
    %v522 = vld [vmem:[%s3 + $0x48] sm:$0xf]
    %v523 = vld [vmem:[%s3 + $0x4c] sm:$0xf]
    %v524 = vld [vmem:[%s3 + $0x50] sm:$0xf]
    %v525 = vld [vmem:[%s3 + $0x54] sm:$0xf]
    %v526 = vld [vmem:[%s3 + $0x58] sm:$0xf]
    %v527 = vld [vmem:[%s3 + $0x5c] sm:$0xf]
    %v528 = vld [vmem:[%s3 + $0x60] sm:$0xf]
    %v529 = vld [vmem:[%s3 + $0x64] sm:$0xf]
    %v530 = vld [vmem:[%s3 + $0x68] sm:$0xf]
    %v531 = vld [vmem:[%s3 + $0x6c] sm:$0xf]
    %v532 = vld [vmem:[%s3 + $0x70] sm:$0xf]
    %v533 = vld [vmem:[%s3 + $0x74] sm:$0xf]
    %v534 = vld [vmem:[%s3 + $0x78] sm:$0xf]
    %v535 = vld [vmem:[%s3 + $0x7c] sm:$0xf]
    %s536 = scalar_lea.vmem %s3, 128
    %v537 = vld [vmem:[%s536] sm:$0xf]
    %v538 = vld [vmem:[%s536 + $0x4] sm:$0xf]
    %v539 = vld [vmem:[%s536 + $0x8] sm:$0xf]
    %v540 = vld [vmem:[%s536 + $0xc] sm:$0xf]
    %v541 = vld [vmem:[%s536 + $0x10] sm:$0xf]
    %v542 = vld [vmem:[%s536 + $0x14] sm:$0xf]
    %v543 = vld [vmem:[%s536 + $0x18] sm:$0xf]
    %v544 = vld [vmem:[%s536 + $0x1c] sm:$0xf]
    %v545 = vld [vmem:[%s536 + $0x20] sm:$0xf]
    %v546 = vld [vmem:[%s536 + $0x24] sm:$0xf]
    %v547 = vld [vmem:[%s536 + $0x28] sm:$0xf]
    %v548 = vld [vmem:[%s536 + $0x2c] sm:$0xf]
    %v549 = vld [vmem:[%s536 + $0x30] sm:$0xf]
    %v550 = vld [vmem:[%s536 + $0x34] sm:$0xf]
    %v551 = vld [vmem:[%s536 + $0x38] sm:$0xf]
    %v552 = vld [vmem:[%s536 + $0x3c] sm:$0xf]
    %v553 = vld [vmem:[%s536 + $0x40] sm:$0xf]
    %v554 = vld [vmem:[%s536 + $0x44] sm:$0xf]
    %v555 = vld [vmem:[%s536 + $0x48] sm:$0xf]
    %v556 = vld [vmem:[%s536 + $0x4c] sm:$0xf]
    %v557 = vld [vmem:[%s536 + $0x50] sm:$0xf]
    %v558 = vld [vmem:[%s536 + $0x54] sm:$0xf]
    %v559 = vld [vmem:[%s536 + $0x58] sm:$0xf]
    %v560 = vld [vmem:[%s536 + $0x5c] sm:$0xf]
    %v561 = vld [vmem:[%s536 + $0x60] sm:$0xf]
    %v562 = vld [vmem:[%s536 + $0x64] sm:$0xf]
    %v563 = vld [vmem:[%s536 + $0x68] sm:$0xf]
    %v564 = vld [vmem:[%s536 + $0x6c] sm:$0xf]
    %v565 = vld [vmem:[%s536 + $0x70] sm:$0xf]
    %v566 = vld [vmem:[%s536 + $0x74] sm:$0xf]
    %v567 = vld [vmem:[%s536 + $0x78] sm:$0xf]
    %v568 = vld [vmem:[%s536 + $0x7c] sm:$0xf]
    %v571 = vunpack.c.l.b16 %v502
    %v572 = vunpack.c.h.b16 %v502
    %v573 = vunpack.c.l.b16 %v503
    %v574 = vunpack.c.h.b16 %v503
    %v575 = vpack.c.b16 %v573, %v571
    %v576 = vpack.c.b16 %v574, %v572
    %v577 = vrot.slane %v575, 1
    %v578 = vrot.slane %v576, 1
    %v613 = vunpack.c.l.b16 %v537
    %v614 = vunpack.c.l.b16 %v538
    %v615 = vunpack.c.l.b16 %v539
    %v616 = vunpack.c.l.b16 %v540
    %v617 = vunpack.c.l.b16 %v541
    %v618 = vunpack.c.l.b16 %v542
    %v619 = vunpack.c.l.b16 %v543
    %v620 = vunpack.c.l.b16 %v544
    %v621 = vunpack.c.l.b16 %v545
    %v622 = vunpack.c.l.b16 %v546
    %v623 = vunpack.c.l.b16 %v547
    %v624 = vunpack.c.l.b16 %v548
    %v625 = vunpack.c.l.b16 %v549
    %v626 = vunpack.c.l.b16 %v550
    %v627 = vunpack.c.l.b16 %v551
    %v628 = vunpack.c.l.b16 %v552
    %v629 = vunpack.c.l.b16 %v553
    %v630 = vunpack.c.l.b16 %v554
    %v631 = vunpack.c.l.b16 %v555
    %v632 = vunpack.c.l.b16 %v556
    %v633 = vunpack.c.l.b16 %v557
    %v634 = vunpack.c.l.b16 %v558
    %v635 = vunpack.c.l.b16 %v559
    %v636 = vunpack.c.l.b16 %v560
    %v637 = vunpack.c.l.b16 %v561
    %v638 = vunpack.c.l.b16 %v562
    %v639 = vunpack.c.l.b16 %v563
    %v640 = vunpack.c.l.b16 %v564
    %v641 = vunpack.c.l.b16 %v565
    %v642 = vunpack.c.l.b16 %v566
    %v643 = vunpack.c.l.b16 %v567
    %v644 = vunpack.c.l.b16 %v568
    %v645 = vpack.c.b16 %v614, %v613
    %v646 = vpack.c.b16 %v616, %v615
    %v647 = vpack.c.b16 %v618, %v617
    %v648 = vpack.c.b16 %v620, %v619
    %v649 = vpack.c.b16 %v622, %v621
    %v650 = vpack.c.b16 %v624, %v623
    %v651 = vpack.c.b16 %v626, %v625
    %v652 = vpack.c.b16 %v628, %v627
    %v653 = vpack.c.b16 %v630, %v629
    %v654 = vpack.c.b16 %v632, %v631
    %v655 = vpack.c.b16 %v634, %v633
    %v656 = vpack.c.b16 %v636, %v635
    %v657 = vpack.c.b16 %v638, %v637
    %v658 = vpack.c.b16 %v640, %v639
    %v659 = vpack.c.b16 %v642, %v641
    %v660 = vpack.c.b16 %v644, %v643
    %677 = vmatprep.subr.bf16.mxu0 0
    %678 = vmatpush1.bf16.msra.mxu0 %v645
    %679 = vmatprep.subr.bf16.mxu0 0
    %680 = vmatpush1.bf16.msra.mxu0 %v646
    %681 = vmatprep.subr.bf16.mxu0 0
    %682 = vmatpush1.bf16.msra.mxu0 %v647
    %683 = vmatprep.subr.bf16.mxu0 0
    %684 = vmatpush1.bf16.msra.mxu0 %v648
    %685 = vmatprep.subr.bf16.mxu0 0
    %686 = vmatpush1.bf16.msra.mxu0 %v649
    %687 = vmatprep.subr.bf16.mxu0 0
    %688 = vmatpush1.bf16.msra.mxu0 %v650
    %689 = vmatprep.subr.bf16.mxu0 0
    %690 = vmatpush1.bf16.msra.mxu0 %v651
    %691 = vmatprep.subr.bf16.mxu0 0
    %692 = vmatpush1.bf16.msra.mxu0 %v652
    %693 = vmatprep.subr.bf16.mxu0 0
    %694 = vmatpush1.bf16.msra.mxu0 %v653
    %695 = vmatprep.subr.bf16.mxu0 0
    %696 = vmatpush1.bf16.msra.mxu0 %v654
    %697 = vmatprep.subr.bf16.mxu0 0
    %698 = vmatpush1.bf16.msra.mxu0 %v655
    %699 = vmatprep.subr.bf16.mxu0 0
    %700 = vmatpush1.bf16.msra.mxu0 %v656
    %701 = vmatprep.subr.bf16.mxu0 0
    %702 = vmatpush1.bf16.msra.mxu0 %v657
    %703 = vmatprep.subr.bf16.mxu0 0
    %704 = vmatpush1.bf16.msra.mxu0 %v658
    %705 = vmatprep.subr.bf16.mxu0 0
    %706 = vmatpush1.bf16.msra.mxu0 %v659
    %707 = vmatprep.subr.bf16.mxu0 0
    %708 = vmatpush1.bf16.msra.mxu0 %v660
    %709 = vmatprep.mubr.bf16.mxu0 %v578
    %710 = vmatmul.mubr.bf16.gmra.mrb[0].mxu0 %v577
    %v711 = vpop.f32.mrb[0].mxu0
    %v712 = vadd.f32 0.0, %v711
    %v713 = vpop.f32.mrb[0].mxu0
    %v714 = vpop.f32.mrb[0].mxu0
    %v715 = vadd.f32 0.0, %v714
    %v716 = vpop.f32.mrb[0].mxu0
    %717 = vdwg.mxu0
    %v720 = vunpack.c.l.b16 %v500
    %v721 = vunpack.c.h.b16 %v500
    %v722 = vunpack.c.l.b16 %v501
    %v723 = vunpack.c.h.b16 %v501
    %v724 = vpack.c.b16 %v722, %v720
    %v725 = vpack.c.b16 %v723, %v721
    %v760 = vunpack.c.l.b16 %v504
    %v761 = vunpack.c.l.b16 %v505
    %v762 = vunpack.c.l.b16 %v506
    %v763 = vunpack.c.l.b16 %v507
    %v764 = vunpack.c.l.b16 %v508
    %v765 = vunpack.c.l.b16 %v509
    %v766 = vunpack.c.l.b16 %v510
    %v767 = vunpack.c.l.b16 %v511
    %v768 = vunpack.c.l.b16 %v512
    %v769 = vunpack.c.l.b16 %v513
    %v770 = vunpack.c.l.b16 %v514
    %v771 = vunpack.c.l.b16 %v515
    %v772 = vunpack.c.l.b16 %v516
    %v773 = vunpack.c.l.b16 %v517
    %v774 = vunpack.c.l.b16 %v518
    %v775 = vunpack.c.l.b16 %v519
    %v776 = vunpack.c.l.b16 %v520
    %v777 = vunpack.c.l.b16 %v521
    %v778 = vunpack.c.l.b16 %v522
    %v779 = vunpack.c.l.b16 %v523
    %v780 = vunpack.c.l.b16 %v524
    %v781 = vunpack.c.l.b16 %v525
    %v782 = vunpack.c.l.b16 %v526
    %v783 = vunpack.c.l.b16 %v527
    %v784 = vunpack.c.l.b16 %v528
    %v785 = vunpack.c.l.b16 %v529
    %v786 = vunpack.c.l.b16 %v530
    %v787 = vunpack.c.l.b16 %v531
    %v788 = vunpack.c.l.b16 %v532
    %v789 = vunpack.c.l.b16 %v533
    %v790 = vunpack.c.l.b16 %v534
    %v791 = vunpack.c.l.b16 %v535
    %v792 = vpack.c.b16 %v761, %v760
    %v793 = vpack.c.b16 %v763, %v762
    %v794 = vpack.c.b16 %v765, %v764
    %v795 = vpack.c.b16 %v767, %v766
    %v796 = vpack.c.b16 %v769, %v768
    %v797 = vpack.c.b16 %v771, %v770
    %v798 = vpack.c.b16 %v773, %v772
    %v799 = vpack.c.b16 %v775, %v774
    %v800 = vpack.c.b16 %v777, %v776
    %v801 = vpack.c.b16 %v779, %v778
    %v802 = vpack.c.b16 %v781, %v780
    %v803 = vpack.c.b16 %v783, %v782
    %v804 = vpack.c.b16 %v785, %v784
    %v805 = vpack.c.b16 %v787, %v786
    %v806 = vpack.c.b16 %v789, %v788
    %v807 = vpack.c.b16 %v791, %v790
    %824 = vmatprep.subr.bf16.mxu0 0
    %825 = vmatpush1.bf16.msra.mxu0 %v792
    %826 = vmatprep.subr.bf16.mxu0 0
    %827 = vmatpush1.bf16.msra.mxu0 %v793
    %828 = vmatprep.subr.bf16.mxu0 0
    %829 = vmatpush1.bf16.msra.mxu0 %v794
    %830 = vmatprep.subr.bf16.mxu0 0
    %831 = vmatpush1.bf16.msra.mxu0 %v795
    %832 = vmatprep.subr.bf16.mxu0 0
    %833 = vmatpush1.bf16.msra.mxu0 %v796
    %834 = vmatprep.subr.bf16.mxu0 0
    %835 = vmatpush1.bf16.msra.mxu0 %v797
    %836 = vmatprep.subr.bf16.mxu0 0
    %837 = vmatpush1.bf16.msra.mxu0 %v798
    %838 = vmatprep.subr.bf16.mxu0 0
    %839 = vmatpush1.bf16.msra.mxu0 %v799
    %840 = vmatprep.subr.bf16.mxu0 0
    %841 = vmatpush1.bf16.msra.mxu0 %v800
    %842 = vmatprep.subr.bf16.mxu0 0
    %843 = vmatpush1.bf16.msra.mxu0 %v801
    %844 = vmatprep.subr.bf16.mxu0 0
    %845 = vmatpush1.bf16.msra.mxu0 %v802
    %846 = vmatprep.subr.bf16.mxu0 0
    %847 = vmatpush1.bf16.msra.mxu0 %v803
    %848 = vmatprep.subr.bf16.mxu0 0
    %849 = vmatpush1.bf16.msra.mxu0 %v804
    %850 = vmatprep.subr.bf16.mxu0 0
    %851 = vmatpush1.bf16.msra.mxu0 %v805
    %852 = vmatprep.subr.bf16.mxu0 0
    %853 = vmatpush1.bf16.msra.mxu0 %v806
    %854 = vmatprep.subr.bf16.mxu0 0
    %855 = vmatpush1.bf16.msra.mxu0 %v807
    %856 = vmatprep.mubr.bf16.mxu0 %v725
    %857 = vmatmul.mubr.bf16.gmra.mrb[0].mxu0 %v724
    %v858 = vpop.f32.mrb[0].mxu0
    %v859 = vadd.f32 %v712, %v858
    %v860 = vpop.f32.mrb[0].mxu0
    %v861 = vpop.f32.mrb[0].mxu0
    %v862 = vadd.f32 %v715, %v861
    %v863 = vpop.f32.mrb[0].mxu0
    %864 = vdwg.mxu0
    %v865 = vld [vmem:[%s4] sm:$0x1]
    %v867 = vlaneseq
    %v868 = vshrl.u32 %v867, 7
    %v869 = vsub.s32 0, %v868
    %v870 = vrot.slane %v865, %v869
    %v872 = vadd.f32 %v859, %v870
    %v873 = vadd.f32 %v862, %v870
    %v874 = vmax.f32 %v872, 0.0
    %v875 = vmax.f32 %v873, 0.0
    %v877 = vrot.slane %v874, 2
    %v880 = vrot.slane %v875, 4
    %v882 = vsel %vm458, %v874, %v877
    %v883 = vsel %vm460, %v882, %v880
    %v884 = vrot.slane %v874, 4
    %v886 = vrot.slane %v875, 6
    %v888 = vsel %vm458, %v877, %v884
    %v889 = vsel %vm460, %v888, %v886
    %v890 = vpack.c.bf16 %v883, %v883
    %891 = vst [vmem:[#allocation3 + $0x4] sm:$0x7] %v890
    %v892 = vpack.c.bf16 %v889, %v889
    %v894 = vunpack.c.l.b16 %v892
    %v895 = vpack.c.b16 %v894, %v894
    %v896 = vrot.slane %v895, 7
    %898 = vst [vmem:[#allocation3] sm:$0xe] %v896
    %v899 = vld [vmem:[#allocation3] sm:$0x77]
    %v900 = vld [vmem:[#allocation3] sm:$0xee]
    %v901 = vld [vmem:[%s5] sm:$0xf]
    %v902 = vld [vmem:[%s5 + $0x4] sm:$0xf]
    %v903 = vld [vmem:[%s5 + $0x8] sm:$0xf]
    %v904 = vld [vmem:[%s5 + $0xc] sm:$0xf]
    %v905 = vld [vmem:[%s5 + $0x10] sm:$0xf]
    %v906 = vld [vmem:[%s5 + $0x14] sm:$0xf]
    %v907 = vld [vmem:[%s5 + $0x18] sm:$0xf]
    %v908 = vld [vmem:[%s5 + $0x1c] sm:$0xf]
    %v909 = vld [vmem:[%s5 + $0x20] sm:$0xf]
    %v910 = vld [vmem:[%s5 + $0x24] sm:$0xf]
    %v911 = vld [vmem:[%s5 + $0x28] sm:$0xf]
    %v912 = vld [vmem:[%s5 + $0x2c] sm:$0xf]
    %v913 = vld [vmem:[%s5 + $0x30] sm:$0xf]
    %v914 = vld [vmem:[%s5 + $0x34] sm:$0xf]
    %v915 = vld [vmem:[%s5 + $0x38] sm:$0xf]
    %v916 = vld [vmem:[%s5 + $0x3c] sm:$0xf]
    %v917 = vld [vmem:[%s5 + $0x40] sm:$0xf]
    %v918 = vld [vmem:[%s5 + $0x44] sm:$0xf]
    %v919 = vld [vmem:[%s5 + $0x48] sm:$0xf]
    %v920 = vld [vmem:[%s5 + $0x4c] sm:$0xf]
    %v921 = vld [vmem:[%s5 + $0x50] sm:$0xf]
    %v922 = vld [vmem:[%s5 + $0x54] sm:$0xf]
    %v923 = vld [vmem:[%s5 + $0x58] sm:$0xf]
    %v924 = vld [vmem:[%s5 + $0x5c] sm:$0xf]
    %v925 = vld [vmem:[%s5 + $0x60] sm:$0xf]
    %v926 = vld [vmem:[%s5 + $0x64] sm:$0xf]
    %v927 = vld [vmem:[%s5 + $0x68] sm:$0xf]
    %v928 = vld [vmem:[%s5 + $0x6c] sm:$0xf]
    %v929 = vld [vmem:[%s5 + $0x70] sm:$0xf]
    %v930 = vld [vmem:[%s5 + $0x74] sm:$0xf]
    %v931 = vld [vmem:[%s5 + $0x78] sm:$0xf]
    %v932 = vld [vmem:[%s5 + $0x7c] sm:$0xf]
    %s933 = scalar_lea.vmem %s5, 128
    %v934 = vld [vmem:[%s933] sm:$0xf]
    %v935 = vld [vmem:[%s933 + $0x4] sm:$0xf]
    %v936 = vld [vmem:[%s933 + $0x8] sm:$0xf]
    %v937 = vld [vmem:[%s933 + $0xc] sm:$0xf]
    %v938 = vld [vmem:[%s933 + $0x10] sm:$0xf]
    %v939 = vld [vmem:[%s933 + $0x14] sm:$0xf]
    %v940 = vld [vmem:[%s933 + $0x18] sm:$0xf]
    %v941 = vld [vmem:[%s933 + $0x1c] sm:$0xf]
    %v942 = vld [vmem:[%s933 + $0x20] sm:$0xf]
    %v943 = vld [vmem:[%s933 + $0x24] sm:$0xf]
    %v944 = vld [vmem:[%s933 + $0x28] sm:$0xf]
    %v945 = vld [vmem:[%s933 + $0x2c] sm:$0xf]
    %v946 = vld [vmem:[%s933 + $0x30] sm:$0xf]
    %v947 = vld [vmem:[%s933 + $0x34] sm:$0xf]
    %v948 = vld [vmem:[%s933 + $0x38] sm:$0xf]
    %v949 = vld [vmem:[%s933 + $0x3c] sm:$0xf]
    %v950 = vld [vmem:[%s933 + $0x40] sm:$0xf]
    %v951 = vld [vmem:[%s933 + $0x44] sm:$0xf]
    %v952 = vld [vmem:[%s933 + $0x48] sm:$0xf]
    %v953 = vld [vmem:[%s933 + $0x4c] sm:$0xf]
    %v954 = vld [vmem:[%s933 + $0x50] sm:$0xf]
    %v955 = vld [vmem:[%s933 + $0x54] sm:$0xf]
    %v956 = vld [vmem:[%s933 + $0x58] sm:$0xf]
    %v957 = vld [vmem:[%s933 + $0x5c] sm:$0xf]
    %v958 = vld [vmem:[%s933 + $0x60] sm:$0xf]
    %v959 = vld [vmem:[%s933 + $0x64] sm:$0xf]
    %v960 = vld [vmem:[%s933 + $0x68] sm:$0xf]
    %v961 = vld [vmem:[%s933 + $0x6c] sm:$0xf]
    %v962 = vld [vmem:[%s933 + $0x70] sm:$0xf]
    %v963 = vld [vmem:[%s933 + $0x74] sm:$0xf]
    %v964 = vld [vmem:[%s933 + $0x78] sm:$0xf]
    %v965 = vld [vmem:[%s933 + $0x7c] sm:$0xf]
    %v967 = vunpack.c.l.b16 %v900
    %v968 = vunpack.c.h.b16 %v900
    %v969 = vpack.c.b16 %v967, %v967
    %v970 = vpack.c.b16 %v968, %v968
    %v971 = vrot.slane %v969, 1
    %v972 = vrot.slane %v970, 1
    %v1007 = vunpack.c.l.b16 %v934
    %v1008 = vunpack.c.l.b16 %v935
    %v1009 = vunpack.c.l.b16 %v936
    %v1010 = vunpack.c.l.b16 %v937
    %v1011 = vunpack.c.l.b16 %v938
    %v1012 = vunpack.c.l.b16 %v939
    %v1013 = vunpack.c.l.b16 %v940
    %v1014 = vunpack.c.l.b16 %v941
    %v1015 = vunpack.c.l.b16 %v942
    %v1016 = vunpack.c.l.b16 %v943
    %v1017 = vunpack.c.l.b16 %v944
    %v1018 = vunpack.c.l.b16 %v945
    %v1019 = vunpack.c.l.b16 %v946
    %v1020 = vunpack.c.l.b16 %v947
    %v1021 = vunpack.c.l.b16 %v948
    %v1022 = vunpack.c.l.b16 %v949
    %v1023 = vunpack.c.l.b16 %v950
    %v1024 = vunpack.c.l.b16 %v951
    %v1025 = vunpack.c.l.b16 %v952
    %v1026 = vunpack.c.l.b16 %v953
    %v1027 = vunpack.c.l.b16 %v954
    %v1028 = vunpack.c.l.b16 %v955
    %v1029 = vunpack.c.l.b16 %v956
    %v1030 = vunpack.c.l.b16 %v957
    %v1031 = vunpack.c.l.b16 %v958
    %v1032 = vunpack.c.l.b16 %v959
    %v1033 = vunpack.c.l.b16 %v960
    %v1034 = vunpack.c.l.b16 %v961
    %v1035 = vunpack.c.l.b16 %v962
    %v1036 = vunpack.c.l.b16 %v963
    %v1037 = vunpack.c.l.b16 %v964
    %v1038 = vunpack.c.l.b16 %v965
    %v1039 = vpack.c.b16 %v1008, %v1007
    %v1040 = vpack.c.b16 %v1010, %v1009
    %v1041 = vpack.c.b16 %v1012, %v1011
    %v1042 = vpack.c.b16 %v1014, %v1013
    %v1043 = vpack.c.b16 %v1016, %v1015
    %v1044 = vpack.c.b16 %v1018, %v1017
    %v1045 = vpack.c.b16 %v1020, %v1019
    %v1046 = vpack.c.b16 %v1022, %v1021
    %v1047 = vpack.c.b16 %v1024, %v1023
    %v1048 = vpack.c.b16 %v1026, %v1025
    %v1049 = vpack.c.b16 %v1028, %v1027
    %v1050 = vpack.c.b16 %v1030, %v1029
    %v1051 = vpack.c.b16 %v1032, %v1031
    %v1052 = vpack.c.b16 %v1034, %v1033
    %v1053 = vpack.c.b16 %v1036, %v1035
    %v1054 = vpack.c.b16 %v1038, %v1037
    %1071 = vmatprep.subr.bf16.mxu0 0
    %1072 = vmatpush1.bf16.msra.mxu0 %v1039
    %1073 = vmatprep.subr.bf16.mxu0 0
    %1074 = vmatpush1.bf16.msra.mxu0 %v1040
    %1075 = vmatprep.subr.bf16.mxu0 0
    %1076 = vmatpush1.bf16.msra.mxu0 %v1041
    %1077 = vmatprep.subr.bf16.mxu0 0
    %1078 = vmatpush1.bf16.msra.mxu0 %v1042
    %1079 = vmatprep.subr.bf16.mxu0 0
    %1080 = vmatpush1.bf16.msra.mxu0 %v1043
    %1081 = vmatprep.subr.bf16.mxu0 0
    %1082 = vmatpush1.bf16.msra.mxu0 %v1044
    %1083 = vmatprep.subr.bf16.mxu0 0
    %1084 = vmatpush1.bf16.msra.mxu0 %v1045
    %1085 = vmatprep.subr.bf16.mxu0 0
    %1086 = vmatpush1.bf16.msra.mxu0 %v1046
    %1087 = vmatprep.subr.bf16.mxu0 0
    %1088 = vmatpush1.bf16.msra.mxu0 %v1047
    %1089 = vmatprep.subr.bf16.mxu0 0
    %1090 = vmatpush1.bf16.msra.mxu0 %v1048
    %1091 = vmatprep.subr.bf16.mxu0 0
    %1092 = vmatpush1.bf16.msra.mxu0 %v1049
    %1093 = vmatprep.subr.bf16.mxu0 0
    %1094 = vmatpush1.bf16.msra.mxu0 %v1050
    %1095 = vmatprep.subr.bf16.mxu0 0
    %1096 = vmatpush1.bf16.msra.mxu0 %v1051
    %1097 = vmatprep.subr.bf16.mxu0 0
    %1098 = vmatpush1.bf16.msra.mxu0 %v1052
    %1099 = vmatprep.subr.bf16.mxu0 0
    %1100 = vmatpush1.bf16.msra.mxu0 %v1053
    %1101 = vmatprep.subr.bf16.mxu0 0
    %1102 = vmatpush1.bf16.msra.mxu0 %v1054
    %1103 = vmatprep.mubr.bf16.mxu0 %v972
    %1104 = vmatmul.mubr.bf16.gmra.mrb[0].mxu0 %v971
    %v1105 = vpop.f32.mrb[0].mxu0
    %v1106 = vadd.f32 0.0, %v1105
    %v1107 = vpop.f32.mrb[0].mxu0
    %v1108 = vpop.f32.mrb[0].mxu0
    %v1109 = vpop.f32.mrb[0].mxu0
    %1110 = vdwg.mxu0
    %v1112 = vunpack.c.l.b16 %v899
    %v1113 = vunpack.c.h.b16 %v899
    %v1114 = vpack.c.b16 %v1112, %v1112
    %v1115 = vpack.c.b16 %v1113, %v1113
    %v1150 = vunpack.c.l.b16 %v901
    %v1151 = vunpack.c.l.b16 %v902
    %v1152 = vunpack.c.l.b16 %v903
    %v1153 = vunpack.c.l.b16 %v904
    %v1154 = vunpack.c.l.b16 %v905
    %v1155 = vunpack.c.l.b16 %v906
    %v1156 = vunpack.c.l.b16 %v907
    %v1157 = vunpack.c.l.b16 %v908
    %v1158 = vunpack.c.l.b16 %v909
    %v1159 = vunpack.c.l.b16 %v910
    %v1160 = vunpack.c.l.b16 %v911
    %v1161 = vunpack.c.l.b16 %v912
    %v1162 = vunpack.c.l.b16 %v913
    %v1163 = vunpack.c.l.b16 %v914
    %v1164 = vunpack.c.l.b16 %v915
    %v1165 = vunpack.c.l.b16 %v916
    %v1166 = vunpack.c.l.b16 %v917
    %v1167 = vunpack.c.l.b16 %v918
    %v1168 = vunpack.c.l.b16 %v919
    %v1169 = vunpack.c.l.b16 %v920
    %v1170 = vunpack.c.l.b16 %v921
    %v1171 = vunpack.c.l.b16 %v922
    %v1172 = vunpack.c.l.b16 %v923
    %v1173 = vunpack.c.l.b16 %v924
    %v1174 = vunpack.c.l.b16 %v925
    %v1175 = vunpack.c.l.b16 %v926
    %v1176 = vunpack.c.l.b16 %v927
    %v1177 = vunpack.c.l.b16 %v928
    %v1178 = vunpack.c.l.b16 %v929
    %v1179 = vunpack.c.l.b16 %v930
    %v1180 = vunpack.c.l.b16 %v931
    %v1181 = vunpack.c.l.b16 %v932
    %v1182 = vpack.c.b16 %v1151, %v1150
    %v1183 = vpack.c.b16 %v1153, %v1152
    %v1184 = vpack.c.b16 %v1155, %v1154
    %v1185 = vpack.c.b16 %v1157, %v1156
    %v1186 = vpack.c.b16 %v1159, %v1158
    %v1187 = vpack.c.b16 %v1161, %v1160
    %v1188 = vpack.c.b16 %v1163, %v1162
    %v1189 = vpack.c.b16 %v1165, %v1164
    %v1190 = vpack.c.b16 %v1167, %v1166
    %v1191 = vpack.c.b16 %v1169, %v1168
    %v1192 = vpack.c.b16 %v1171, %v1170
    %v1193 = vpack.c.b16 %v1173, %v1172
    %v1194 = vpack.c.b16 %v1175, %v1174
    %v1195 = vpack.c.b16 %v1177, %v1176
    %v1196 = vpack.c.b16 %v1179, %v1178
    %v1197 = vpack.c.b16 %v1181, %v1180
    %1214 = vmatprep.subr.bf16.mxu0 0
    %1215 = vmatpush1.bf16.msra.mxu0 %v1182
    %1216 = vmatprep.subr.bf16.mxu0 0
    %1217 = vmatpush1.bf16.msra.mxu0 %v1183
    %1218 = vmatprep.subr.bf16.mxu0 0
    %1219 = vmatpush1.bf16.msra.mxu0 %v1184
    %1220 = vmatprep.subr.bf16.mxu0 0
    %1221 = vmatpush1.bf16.msra.mxu0 %v1185
    %1222 = vmatprep.subr.bf16.mxu0 0
    %1223 = vmatpush1.bf16.msra.mxu0 %v1186
    %1224 = vmatprep.subr.bf16.mxu0 0
    %1225 = vmatpush1.bf16.msra.mxu0 %v1187
    %1226 = vmatprep.subr.bf16.mxu0 0
    %1227 = vmatpush1.bf16.msra.mxu0 %v1188
    %1228 = vmatprep.subr.bf16.mxu0 0
    %1229 = vmatpush1.bf16.msra.mxu0 %v1189
    %1230 = vmatprep.subr.bf16.mxu0 0
    %1231 = vmatpush1.bf16.msra.mxu0 %v1190
    %1232 = vmatprep.subr.bf16.mxu0 0
    %1233 = vmatpush1.bf16.msra.mxu0 %v1191
    %1234 = vmatprep.subr.bf16.mxu0 0
    %1235 = vmatpush1.bf16.msra.mxu0 %v1192
    %1236 = vmatprep.subr.bf16.mxu0 0
    %1237 = vmatpush1.bf16.msra.mxu0 %v1193
    %1238 = vmatprep.subr.bf16.mxu0 0
    %1239 = vmatpush1.bf16.msra.mxu0 %v1194
    %1240 = vmatprep.subr.bf16.mxu0 0
    %1241 = vmatpush1.bf16.msra.mxu0 %v1195
    %1242 = vmatprep.subr.bf16.mxu0 0
    %1243 = vmatpush1.bf16.msra.mxu0 %v1196
    %1244 = vmatprep.subr.bf16.mxu0 0
    %1245 = vmatpush1.bf16.msra.mxu0 %v1197
    %1246 = vmatprep.mubr.bf16.mxu0 %v1115
    %1247 = vmatmul.mubr.bf16.gmra.mrb[0].mxu0 %v1114
    %v1248 = vpop.f32.mrb[0].mxu0
    %v1249 = vadd.f32 %v1106, %v1248
    %v1250 = vpop.f32.mrb[0].mxu0
    %v1251 = vpop.f32.mrb[0].mxu0
    %v1252 = vpop.f32.mrb[0].mxu0
    %1253 = vdwg.mxu0
    %v1254 = vld [vmem:[%s6] sm:$0x1]
    %v1256 = vlaneseq
    %v1257 = vshrl.u32 %v1256, 7
    %v1258 = vsub.s32 0, %v1257
    %v1259 = vrot.slane %v1254, %v1258
    %v1261 = vadd.f32 %v1249, %v1259
    %v1262 = vmax.f32 %v1261, 0.0
    %v1264 = vrot.slane %v1262, 2
    %v1266 = vrot.slane %v1262, 4
    %v1268 = vpack.c.bf16 %v1262, %v1262
    %v1269 = vpack.c.bf16 %v1264, %v1264
    %v1270 = vpack.c.bf16 %v1266, %v1266
    %v1271 = vld [vmem:[%s7] sm:$0xf]
    %v1272 = vld [vmem:[%s7 + $0x4] sm:$0xf]
    %v1273 = vld [vmem:[%s7 + $0x8] sm:$0xf]
    %v1274 = vld [vmem:[%s7 + $0xc] sm:$0xf]
    %v1275 = vld [vmem:[%s7 + $0x10] sm:$0xf]
    %v1276 = vld [vmem:[%s7 + $0x14] sm:$0xf]
    %v1277 = vld [vmem:[%s7 + $0x18] sm:$0xf]
    %v1278 = vld [vmem:[%s7 + $0x1c] sm:$0xf]
    %v1279 = vld [vmem:[%s7 + $0x20] sm:$0xf]
    %v1280 = vld [vmem:[%s7 + $0x24] sm:$0xf]
    %v1281 = vld [vmem:[%s7 + $0x28] sm:$0xf]
    %v1282 = vld [vmem:[%s7 + $0x2c] sm:$0xf]
    %v1283 = vld [vmem:[%s7 + $0x30] sm:$0xf]
    %v1284 = vld [vmem:[%s7 + $0x34] sm:$0xf]
    %v1285 = vld [vmem:[%s7 + $0x38] sm:$0xf]
    %v1286 = vld [vmem:[%s7 + $0x3c] sm:$0xf]
    %v1287 = vld [vmem:[%s7 + $0x40] sm:$0xf]
    %v1288 = vld [vmem:[%s7 + $0x44] sm:$0xf]
    %v1289 = vld [vmem:[%s7 + $0x48] sm:$0xf]
    %v1290 = vld [vmem:[%s7 + $0x4c] sm:$0xf]
    %v1291 = vld [vmem:[%s7 + $0x50] sm:$0xf]
    %v1292 = vld [vmem:[%s7 + $0x54] sm:$0xf]
    %v1293 = vld [vmem:[%s7 + $0x58] sm:$0xf]
    %v1294 = vld [vmem:[%s7 + $0x5c] sm:$0xf]
    %v1295 = vld [vmem:[%s7 + $0x60] sm:$0xf]
    %v1296 = vld [vmem:[%s7 + $0x64] sm:$0xf]
    %v1297 = vld [vmem:[%s7 + $0x68] sm:$0xf]
    %v1298 = vld [vmem:[%s7 + $0x6c] sm:$0xf]
    %v1299 = vld [vmem:[%s7 + $0x70] sm:$0xf]
    %v1300 = vld [vmem:[%s7 + $0x74] sm:$0xf]
    %v1301 = vld [vmem:[%s7 + $0x78] sm:$0xf]
    %v1302 = vld [vmem:[%s7 + $0x7c] sm:$0xf]
    %v1303 = vld [vmem:[%s7 + $0x80] sm:$0xf]
    %v1304 = vld [vmem:[%s7 + $0x84] sm:$0xf]
    %v1305 = vld [vmem:[%s7 + $0x88] sm:$0xf]
    %v1306 = vld [vmem:[%s7 + $0x8c] sm:$0xf]
    %v1307 = vld [vmem:[%s7 + $0x90] sm:$0xf]
    %v1308 = vld [vmem:[%s7 + $0x94] sm:$0xf]
    %v1309 = vld [vmem:[%s7 + $0x98] sm:$0xf]
    %v1310 = vld [vmem:[%s7 + $0x9c] sm:$0xf]
    %v1311 = vld [vmem:[%s7 + $0xa0] sm:$0xf]
    %v1312 = vld [vmem:[%s7 + $0xa4] sm:$0xf]
    %v1313 = vld [vmem:[%s7 + $0xa8] sm:$0xf]
    %v1314 = vld [vmem:[%s7 + $0xac] sm:$0xf]
    %v1315 = vld [vmem:[%s7 + $0xb0] sm:$0xf]
    %v1316 = vld [vmem:[%s7 + $0xb4] sm:$0xf]
    %v1317 = vld [vmem:[%s7 + $0xb8] sm:$0xf]
    %v1318 = vld [vmem:[%s7 + $0xbc] sm:$0xf]
    %v1319 = vld [vmem:[%s8] sm:$0x1]
    %v1321 = vlaneseq
    %v1322 = vshrl.u32 %v1321, 7
    %v1323 = vsub.s32 0, %v1322
    %v1324 = vrot.slane %v1319, %v1323
    %v1374 = vunpack.c.l.b16 %v1271
    %v1375 = vunpack.c.l.b16 %v1272
    %v1376 = vunpack.c.l.b16 %v1273
    %v1377 = vunpack.c.l.b16 %v1274
    %v1378 = vunpack.c.l.b16 %v1275
    %v1379 = vunpack.c.l.b16 %v1276
    %v1380 = vunpack.c.l.b16 %v1277
    %v1381 = vunpack.c.l.b16 %v1278
    %v1382 = vunpack.c.l.b16 %v1279
    %v1383 = vunpack.c.l.b16 %v1280
    %v1384 = vunpack.c.l.b16 %v1281
    %v1385 = vunpack.c.l.b16 %v1282
    %v1386 = vunpack.c.l.b16 %v1283
    %v1387 = vunpack.c.l.b16 %v1284
    %v1388 = vunpack.c.l.b16 %v1285
    %v1389 = vunpack.c.l.b16 %v1286
    %v1390 = vunpack.c.l.b16 %v1287
    %v1391 = vunpack.c.l.b16 %v1288
    %v1392 = vunpack.c.l.b16 %v1289
    %v1393 = vunpack.c.l.b16 %v1290
    %v1394 = vunpack.c.l.b16 %v1291
    %v1395 = vunpack.c.l.b16 %v1292
    %v1396 = vunpack.c.l.b16 %v1293
    %v1397 = vunpack.c.l.b16 %v1294
    %v1398 = vunpack.c.l.b16 %v1295
    %v1399 = vunpack.c.l.b16 %v1296
    %v1400 = vunpack.c.l.b16 %v1297
    %v1401 = vunpack.c.l.b16 %v1298
    %v1402 = vunpack.c.l.b16 %v1299
    %v1403 = vunpack.c.l.b16 %v1300
    %v1404 = vunpack.c.l.b16 %v1301
    %v1405 = vunpack.c.l.b16 %v1302
    %v1406 = vunpack.c.l.b16 %v1303
    %v1407 = vunpack.c.l.b16 %v1304
    %v1408 = vunpack.c.l.b16 %v1305
    %v1409 = vunpack.c.l.b16 %v1306
    %v1410 = vunpack.c.l.b16 %v1307
    %v1411 = vunpack.c.l.b16 %v1308
    %v1412 = vunpack.c.l.b16 %v1309
    %v1413 = vunpack.c.l.b16 %v1310
    %v1414 = vunpack.c.l.b16 %v1311
    %v1415 = vunpack.c.l.b16 %v1312
    %v1416 = vunpack.c.l.b16 %v1313
    %v1417 = vunpack.c.l.b16 %v1314
    %v1418 = vunpack.c.l.b16 %v1315
    %v1419 = vunpack.c.l.b16 %v1316
    %v1420 = vunpack.c.l.b16 %v1317
    %v1421 = vunpack.c.l.b16 %v1318
    %v1422 = vpack.c.b16 %v1375, %v1374
    %v1423 = vpack.c.b16 %v1377, %v1376
    %v1424 = vpack.c.b16 %v1379, %v1378
    %v1425 = vpack.c.b16 %v1381, %v1380
    %v1426 = vpack.c.b16 %v1383, %v1382
    %v1427 = vpack.c.b16 %v1385, %v1384
    %v1428 = vpack.c.b16 %v1387, %v1386
    %v1429 = vpack.c.b16 %v1389, %v1388
    %v1430 = vpack.c.b16 %v1391, %v1390
    %v1431 = vpack.c.b16 %v1393, %v1392
    %v1432 = vpack.c.b16 %v1395, %v1394
    %v1433 = vpack.c.b16 %v1397, %v1396
    %v1434 = vpack.c.b16 %v1399, %v1398
    %v1435 = vpack.c.b16 %v1401, %v1400
    %v1436 = vpack.c.b16 %v1403, %v1402
    %v1437 = vpack.c.b16 %v1405, %v1404
    %v1438 = vpack.c.b16 %v1407, %v1406
    %v1439 = vpack.c.b16 %v1409, %v1408
    %v1440 = vpack.c.b16 %v1411, %v1410
    %v1441 = vpack.c.b16 %v1413, %v1412
    %v1442 = vpack.c.b16 %v1415, %v1414
    %v1443 = vpack.c.b16 %v1417, %v1416
    %v1444 = vpack.c.b16 %v1419, %v1418
    %v1445 = vpack.c.b16 %v1421, %v1420
    %1470 = vmatprep.subr.bf16.mxu0 0
    %1471 = vmatpush1.bf16.msra.mxu0 %v1422
    %1472 = vmatprep.subr.bf16.mxu0 0
    %1473 = vmatpush1.bf16.msra.mxu0 %v1423
    %1474 = vmatprep.subr.bf16.mxu0 0
    %1475 = vmatpush1.bf16.msra.mxu0 %v1424
    %1476 = vmatprep.subr.bf16.mxu0 0
    %1477 = vmatpush1.bf16.msra.mxu0 %v1425
    %1478 = vmatprep.subr.bf16.mxu0 0
    %1479 = vmatpush1.bf16.msra.mxu0 %v1426
    %1480 = vmatprep.subr.bf16.mxu0 0
    %1481 = vmatpush1.bf16.msra.mxu0 %v1427
    %1482 = vmatprep.subr.bf16.mxu0 0
    %1483 = vmatpush1.bf16.msra.mxu0 %v1428
    %1484 = vmatprep.subr.bf16.mxu0 0
    %1485 = vmatpush1.bf16.msra.mxu0 %v1429
    %1486 = vmatprep.subr.bf16.mxu0 0
    %1487 = vmatpush1.bf16.msra.mxu0 %v1430
    %1488 = vmatprep.subr.bf16.mxu0 0
    %1489 = vmatpush1.bf16.msra.mxu0 %v1431
    %1490 = vmatprep.subr.bf16.mxu0 0
    %1491 = vmatpush1.bf16.msra.mxu0 %v1432
    %1492 = vmatprep.subr.bf16.mxu0 0
    %1493 = vmatpush1.bf16.msra.mxu0 %v1433
    %1494 = vmatprep.subr.bf16.mxu0 0
    %1495 = vmatpush1.bf16.msra.mxu0 %v1434
    %1496 = vmatprep.subr.bf16.mxu0 0
    %1497 = vmatpush1.bf16.msra.mxu0 %v1435
    %1498 = vmatprep.subr.bf16.mxu0 0
    %1499 = vmatpush1.bf16.msra.mxu0 %v1436
    %1500 = vmatprep.subr.bf16.mxu0 0
    %1501 = vmatpush1.bf16.msra.mxu0 %v1437
    %1502 = vmatprep.mubr.bf16.mxu0 %v1269
    %1503 = vmatmul.mubr.bf16.gmra.mrb[0].mxu0 %v1268
    %v1504 = vpop.f32.mrb[0].mxu0
    %v1505 = vadd.f32 %v1324, %v1504
    %v1506 = vpop.f32.mrb[0].mxu0
    %v1507 = vpop.f32.mrb[0].mxu0
    %v1508 = vpop.f32.mrb[0].mxu0
    %1509 = vdwg.mxu0
    %1510 = vmatprep.subr.bf16.mxu0 0
    %1511 = vmatpush1.bf16.msra.mxu0 %v1438
    %1512 = vmatprep.subr.bf16.mxu0 0
    %1513 = vmatpush1.bf16.msra.mxu0 %v1439
    %1514 = vmatprep.subr.bf16.mxu0 0
    %1515 = vmatpush1.bf16.msra.mxu0 %v1440
    %1516 = vmatprep.subr.bf16.mxu0 0
    %1517 = vmatpush1.bf16.msra.mxu0 %v1441
    %1518 = vmatprep.subr.bf16.mxu0 0
    %1519 = vmatpush1.bf16.msra.mxu0 %v1442
    %1520 = vmatprep.subr.bf16.mxu0 0
    %1521 = vmatpush1.bf16.msra.mxu0 %v1443
    %1522 = vmatprep.subr.bf16.mxu0 0
    %1523 = vmatpush1.bf16.msra.mxu0 %v1444
    %1524 = vmatprep.subr.bf16.mxu0 0
    %1525 = vmatpush1.bf16.msra.mxu0 %v1445
    %1526 = vmatprep.subr.bf16.mxu0 0
    %1527 = vmatpush1.bf16.msra.mxu0 0
    %1528 = vmatprep.subr.bf16.mxu0 0
    %1529 = vmatpush1.bf16.msra.mxu0 0
    %1530 = vmatprep.subr.bf16.mxu0 0
    %1531 = vmatpush1.bf16.msra.mxu0 0
    %1532 = vmatprep.subr.bf16.mxu0 0
    %1533 = vmatpush1.bf16.msra.mxu0 0
    %1534 = vmatprep.subr.bf16.mxu0 0
    %1535 = vmatpush1.bf16.msra.mxu0 0
    %1536 = vmatprep.subr.bf16.mxu0 0
    %1537 = vmatpush1.bf16.msra.mxu0 0
    %1538 = vmatprep.subr.bf16.mxu0 0
    %1539 = vmatpush1.bf16.msra.mxu0 0
    %1540 = vmatprep.subr.bf16.mxu0 0
    %1541 = vmatpush1.bf16.msra.mxu0 0
    %1542 = vmatprep.mubr.bf16.mxu0 0
    %1543 = vmatmul.mubr.bf16.gmra.mrb[0].mxu0 %v1270
    %v1544 = vpop.f32.mrb[0].mxu0
    %v1545 = vadd.f32 %v1505, %v1544
    %v1546 = vpop.f32.mrb[0].mxu0
    %v1547 = vpop.f32.mrb[0].mxu0
    %v1548 = vpop.f32.mrb[0].mxu0
    %1549 = vdwg.mxu0
    %1550 = vst [vmem:[#allocation4] sm:$0x3] %v1545
    // Predicated region
    $region38: #{encoder_forward.1} parent=1 // pred_check
      _
    $region39: #{encoder_forward.1} parent=1 // pred_check_branch
      %1552 = sbr.rel (0) target = $region41
    $region40: #{encoder_forward.1} parent=1 // pred_region
      %s1554 = ssub.s32 32, 32
      %1555 = vsyncadd [#allocation5], %s1554
      %s1557 = sshll.u32 [#allocation4], 4
      %s1558 = int_to_ptr.vmem [resolvable:$true] %s1557
      %1560 = dma.vmem_to_hbm [thread:$0]  %s1558, 32, %s9, [#allocation5]
    $region41: #{encoder_forward.1} parent=1 // pred_fallthru
      _
    // Predicated region
    $region42: #{encoder_forward.1} parent=1 // pred_check
      _
    $region43: #{encoder_forward.1} parent=1 // pred_check_branch
      %1562 = sbr.rel (0) target = $region45
    $region44: #{encoder_forward.1} parent=1 // pred_region
      %1563 = dma.done [#allocation5], 32
    $region45: #{encoder_forward.1} parent=1 // pred_fallthru
      _
    %1564 = vsyncpa [#allocation5], 1

</llo_original>
